<compile_context>
chip_gen: v7x
topology: tpu7x:2x2x1
jax: 0.10.0
libtpu: 0.0.40
codegen_flags: <defaults>
</compile_context>

<pallas_src>
import functools
import math

import jax
import jax.numpy as jnp
from jax.experimental import pallas as pl
from jax.experimental.pallas import tpu as pltpu


def _leaky_relu(x, slope=0.2):
    return jnp.where(x > 0, x, slope * x)


def _round_up(x, m):
    return ((x + m - 1) // m) * m


def _mlp_softmax_kernel(lat_ref, b1c_ref,
                        w1_ref, w2_ref, b2_ref, w3_ref, b3_ref, w4_ref, b4_ref,
                        out_ref, h1_ref, *, n_valid_classes):
    c = pl.program_id(1)

    # Component-invariant layer-1 latent matmul: compute once per batch block (c == 0),
    # carry in VMEM scratch across the innermost ("arbitrary") component axis.
    @pl.when(c == 0)
    def _():
        h1_ref[...] = jnp.dot(lat_ref[...], w1_ref[...],
                              preferred_element_type=jnp.float32)

    # Per-component layer-1 bias (one-hot row of W1 folded with b1); aligned dynamic row pick.
    row = pl.multiple_of(c * 8, 8)
    b1 = b1c_ref[pl.ds(row, 1), :]                                   # (1, H1p) f32

    h = _leaky_relu(h1_ref[...] + b1)                                # (bm, H1p) f32

    # layer 2
    h = jnp.dot(h.astype(w2_ref.dtype), w2_ref[...],
                preferred_element_type=jnp.float32) + b2_ref[...]
    h = _leaky_relu(h)

    # layer 3
    h = jnp.dot(h.astype(w3_ref.dtype), w3_ref[...],
                preferred_element_type=jnp.float32) + b3_ref[...]
    h = _leaky_relu(h)

    # final linear + softmax over the (unpadded) class lanes
    logits = jnp.dot(h.astype(w4_ref.dtype), w4_ref[...],
                     preferred_element_type=jnp.float32) + b4_ref[...]
    if n_valid_classes is not None:
        lane = jax.lax.broadcasted_iota(jnp.int32, logits.shape, 1)
        logits = jnp.where(lane < n_valid_classes, logits, jnp.float32(-1e30))
    m = jnp.max(logits, axis=-1, keepdims=True)
    e = jnp.exp(logits - m)
    inv = pl.reciprocal(jnp.sum(e, axis=-1, keepdims=True), approx=True)
    out_ref[...] = (e * inv).astype(out_ref.dtype)


def prepare_params(params, latent_dim, n_components, compute_dtype=jnp.bfloat16):
    """One-time parameter preprocessing: fold one-hot rows into per-component bias, pad all
    feature dims to multiples of 128, cast weights to the MXU compute dtype."""
    w1, b1, w2, b2, w3, b3, w4, b4 = params           # w: (in, out) f32, b: (1, out) f32
    H1, H2, H3, C = w1.shape[1], w2.shape[1], w3.shape[1], w4.shape[1]
    Lp = _round_up(latent_dim, 128)
    H1p, H2p, H3p, Cp = (_round_up(d, 128) for d in (H1, H2, H3, C))

    # Fold the one-hot part of layer 1 into a per-component bias table.
    w1_lab = w1[:n_components, :]                     # (n_components, H1)
    w1_lat = w1[n_components:, :]                     # (latent_dim, H1)
    b1c = w1_lab + b1                                 # (n_components, H1)
    b1c = jnp.pad(b1c, ((0, 0), (0, H1p - H1)))
    b1c = jnp.repeat(b1c, 8, axis=0)                  # (n_components*8, H1p): 8-aligned rows

    def pad_w(w, rows, cols):
        return jnp.pad(w, ((0, rows - w.shape[0]),
                           (0, cols - w.shape[1]))).astype(compute_dtype)

    w1p = pad_w(w1_lat, Lp, H1p)
    w2p = pad_w(w2, H1p, H2p)
    w3p = pad_w(w3, H2p, H3p)
    w4p = pad_w(w4, H3p, Cp)
    b2p = jnp.pad(b2, ((0, 0), (0, H2p - H2)))
    b3p = jnp.pad(b3, ((0, 0), (0, H3p - H3)))
    b4p = jnp.pad(b4, ((0, 0), (0, Cp - C)))

    tensors = (b1c, w1p, w2p, b2p, w3p, b3p, w4p, b4p)
    meta = dict(latent_dim=latent_dim, n_components=n_components, n_classes=C,
                Lp=Lp, H1p=H1p, H2p=H2p, H3p=H3p, Cp=Cp, compute_dtype=compute_dtype)
    return tensors, meta


def conditional_component_generator_forward(latent, prepared, *, block_m=256,
                                             out_dtype=jnp.float32,
                                             vmem_limit_bytes=None):
    """latent: (B, latent_dim) f32 -> (B, n_components, n_classes)."""
    tensors, meta = prepared
    b1c, w1p, w2p, b2p, w3p, b3p, w4p, b4p = tensors
    n_components = meta["n_components"]
    C, Cp = meta["n_classes"], meta["Cp"]
    Lp, H1p = meta["Lp"], meta["H1p"]
    compute_dtype = meta["compute_dtype"]

    B, latent_dim = latent.shape
    assert latent_dim == meta["latent_dim"]

    # Batch tiling: big row blocks; prefer >=2 batch blocks so the 2 TCs on v7x can split the
    # "parallel" batch axis (the component axis is "arbitrary" because of the scratch carry).
    bm = max(8, min(block_m, _round_up(B, 8)))
    if _round_up(B, 8) // bm < 2 and _round_up(B, 8) >= 16:
        bm = max(8, _round_up(_round_up(B, 8) // 2, 8))
    B_pad = _round_up(B, bm)

    lat = jnp.pad(latent, ((0, B_pad - B), (0, Lp - latent_dim))).astype(compute_dtype)

    grid = (B_pad // bm, n_components)
    kernel = functools.partial(_mlp_softmax_kernel,
                               n_valid_classes=(C if Cp != C else None))

    if vmem_limit_bytes is None:
        w_bytes = sum(int(t.size) * t.dtype.itemsize for t in tensors)
        est = (w_bytes                                               # single-buffered weights
               + 2 * bm * Lp * jnp.dtype(compute_dtype).itemsize     # latent blocks (x2 bufs)
               + 2 * bm * Cp * jnp.dtype(out_dtype).itemsize         # output blocks (x2 bufs)
               + bm * H1p * 4)                                       # layer-1 scratch
        vmem_limit_bytes = int(min(max(2 * est, 32 * 2 ** 20), 64 * 2 ** 20))

    def _call(single_buffer_weights):
        def const_spec(shape):
            # Grid-invariant operand: index_map is constant; a second pipeline buffer is waste.
            if single_buffer_weights:
                return pl.BlockSpec(shape, lambda i, c: (0, 0),
                                    pipeline_mode=pl.Buffered(1))
            return pl.BlockSpec(shape, lambda i, c: (0, 0))

        return pl.pallas_call(
            kernel,
            out_shape=jax.ShapeDtypeStruct((B_pad, n_components * Cp), out_dtype),
            grid_spec=pltpu.PrefetchScalarGridSpec(
                num_scalar_prefetch=0,
                grid=grid,
                in_specs=[
                    pl.BlockSpec((bm, Lp), lambda i, c: (i, 0)),     # latent rows
                    const_spec(b1c.shape),                           # per-component L1 bias
                    const_spec(w1p.shape),
                    const_spec(w2p.shape),
                    const_spec(b2p.shape),
                    const_spec(w3p.shape),
                    const_spec(b3p.shape),
                    const_spec(w4p.shape),
                    const_spec(b4p.shape),
                ],
                out_specs=pl.BlockSpec((bm, Cp), lambda i, c: (i, c)),
                scratch_shapes=[pltpu.VMEM((bm, H1p), jnp.float32)],
            ),
            compiler_params=pltpu.CompilerParams(
                dimension_semantics=("parallel", "arbitrary"),
                vmem_limit_bytes=vmem_limit_bytes),
        )(lat, b1c, w1p, w2p, b2p, w3p, b3p, w4p, b4p)

    try:
        out = _call(True)
    except Exception:           # pl.Buffered(1) not supported on this install -> default bufs
        out = _call(False)

    # (B_pad, n_components*Cp) -> view reshape + slice; no transpose / full-tensor copy.
    out = out.reshape(B_pad, n_components, Cp)[:B, :, :C]
    return out


def init_params(key, latent_dim, n_components, n_classes, n_features):
    """kaiming_normal_-style weights (stored as (in, out)) + PyTorch-default uniform biases."""
    dims = [
        (n_components + latent_dim, n_features),
        (n_features, n_features * 2),
        (n_features * 2, n_features * 4),
        (n_features * 4, n_classes),
    ]
    params = []
    for fan_in, fan_out in dims:
        kw, kb, key = jax.random.split(key, 3)
        w = jax.random.normal(kw, (fan_in, fan_out), dtype=jnp.float32) * math.sqrt(2.0 / fan_in)
        bound = 1.0 / math.sqrt(fan_in)
        b = jax.random.uniform(kb, (1, fan_out), dtype=jnp.float32,
                               minval=-bound, maxval=bound)
        params += [w, b]
    return params


def reference_forward(latent, params, n_components):
    """Pure-JAX f32 reference of the PyTorch forward."""
    w1, b1, w2, b2, w3, b3, w4, b4 = params
    B = latent.shape[0]
    outs = []
    for c in range(n_components):
        labels = jnp.zeros((B, n_components), latent.dtype).at[:, c].set(1.0)
        x = jnp.concatenate([labels, latent], axis=1)
        h = _leaky_relu(x @ w1 + b1)
        h = _leaky_relu(h @ w2 + b2)
        h = _leaky_relu(h @ w3 + b3)
        logits = h @ w4 + b4
        outs.append(jax.nn.softmax(logits, axis=1)[:, None, :])
    return jnp.concatenate(outs, axis=1)


if __name__ == "__main__":
    B = 2
    latent_dim = 16
    n_components = 4
    n_classes = 8
    n_features = 32

    key = jax.random.PRNGKey(0)
    k_lat, k_par = jax.random.split(key)
    latent = jax.random.normal(k_lat, (B, latent_dim), dtype=jnp.float32)
    params = init_params(k_par, latent_dim, n_components, n_classes, n_features)

    ref = reference_forward(latent, params, n_components)

    # Strict correctness check: f32 compute path.
    prep_f32 = prepare_params(params, latent_dim, n_components, compute_dtype=jnp.float32)
    out_f32 = conditional_component_generator_forward(latent, prep_f32)
    out_f32 = jax.block_until_ready(out_f32)
    assert out_f32.shape == (B, n_components, n_classes)
    assert jnp.allclose(out_f32, ref, atol=1e-3, rtol=1e-3)

    # Fast path: bf16 matmuls (f32 accumulation), looser tolerance.
    prep_bf16 = prepare_params(params, latent_dim, n_components, compute_dtype=jnp.bfloat16)
    out_bf16 = conditional_component_generator_forward(latent, prep_bf16)
    out_bf16 = jax.block_until_ready(out_bf16)
    assert out_bf16.shape == (B, n_components, n_classes)
    assert jnp.allclose(out_bf16, ref, atol=3e-2, rtol=0)

    # rows of a softmax should sum to 1 (approx reciprocal -> slightly looser)
    assert jnp.allclose(out_f32.sum(-1), jnp.ones((B, n_components)), atol=5e-3)
    assert jnp.allclose(out_bf16.sum(-1), jnp.ones((B, n_components)), atol=5e-3)

    print("KERNEL_OK")
</pallas_src>

<mosaic_0001>
module attributes {stable_mosaic.version = 11 : i64} {
  func.func @_mlp_softmax_kernel(%arg0: i32, %arg1: i32, %arg2: memref<8x128xf32, #tpu.memory_space<vmem>>, %arg3: memref<32x128xf32, #tpu.memory_space<vmem>>, %arg4: memref<128x128xf32, #tpu.memory_space<vmem>>, %arg5: memref<128x128xf32, #tpu.memory_space<vmem>>, %arg6: memref<1x128xf32, #tpu.memory_space<vmem>>, %arg7: memref<128x128xf32, #tpu.memory_space<vmem>>, %arg8: memref<1x128xf32, #tpu.memory_space<vmem>>, %arg9: memref<128x128xf32, #tpu.memory_space<vmem>>, %arg10: memref<1x128xf32, #tpu.memory_space<vmem>>, %arg11: memref<8x128xf32, #tpu.memory_space<vmem>>, %arg12: memref<8x128xf32, #tpu.memory_space<vmem>>) attributes {dimension_semantics = [#tpu.dimension_semantics<parallel>, #tpu.dimension_semantics<arbitrary>], iteration_bounds = array<i64: 1, 4>, scalar_prefetch = 0 : i64, scratch_operands = 1 : i64, tpu.core_type = #tpu.core_type<tc>, window_params = [{transform_indices = @transform_0, window_bounds = array<i64: 8, 128>}, {pipeline_mode = #tpu.pipeline_mode<synchronous>, transform_indices = @transform_1, window_bounds = array<i64: 32, 128>}, {pipeline_mode = #tpu.pipeline_mode<synchronous>, transform_indices = @transform_2, window_bounds = array<i64: 128, 128>}, {pipeline_mode = #tpu.pipeline_mode<synchronous>, transform_indices = @transform_3, window_bounds = array<i64: 128, 128>}, {pipeline_mode = #tpu.pipeline_mode<synchronous>, transform_indices = @transform_4, window_bounds = array<i64: 1, 128>}, {pipeline_mode = #tpu.pipeline_mode<synchronous>, transform_indices = @transform_5, window_bounds = array<i64: 128, 128>}, {pipeline_mode = #tpu.pipeline_mode<synchronous>, transform_indices = @transform_6, window_bounds = array<i64: 1, 128>}, {pipeline_mode = #tpu.pipeline_mode<synchronous>, transform_indices = @transform_7, window_bounds = array<i64: 128, 128>}, {pipeline_mode = #tpu.pipeline_mode<synchronous>, transform_indices = @transform_8, window_bounds = array<i64: 1, 128>}, {transform_indices = @transform_9, window_bounds = array<i64: 8, 128>}]} {
    %c0_i32 = arith.constant 0 : i32
    %0 = arith.cmpi eq, %arg1, %c0_i32 : i32
    %1 = arith.extui %0 : i1 to i32
    %c0_i32_0 = arith.constant 0 : i32
    %2 = arith.cmpi ne, %1, %c0_i32_0 : i32
    scf.if %2 {
      %c0_29 = arith.constant 0 : index
      %c0_30 = arith.constant 0 : index
      %56 = vector.load %arg2[%c0_29, %c0_30] : memref<8x128xf32, #tpu.memory_space<vmem>>, vector<8x128xf32>
      %c0_31 = arith.constant 0 : index
      %c0_32 = arith.constant 0 : index
      %57 = vector.load %arg4[%c0_31, %c0_32] : memref<128x128xf32, #tpu.memory_space<vmem>>, vector<128x128xf32>
      %cst_33 = arith.constant dense<0.000000e+00> : vector<8x128xf32>
      %58 = tpu.matmul %56, %57, %cst_33 {dimension_numbers = #tpu.dot_dimension_numbers<[1], [0], [0], [1], [0, 0, 1, 1], [], []>} : vector<8x128xf32>, vector<128x128xf32>, vector<8x128xf32> -> vector<8x128xf32>
      %c0_34 = arith.constant 0 : index
      %c0_35 = arith.constant 0 : index
      %59 = vector.load %arg12[%c0_34, %c0_35] : memref<8x128xf32, #tpu.memory_space<vmem>>, vector<8x128xf32>
      tpu.vector_store %arg12[%c0_34, %c0_35], %58 {strides = array<i32>} : memref<8x128xf32, #tpu.memory_space<vmem>>, vector<8x128xf32>,
    } else {
    }
    %c8_i32 = arith.constant 8 : i32
    %3 = arith.muli %arg1, %c8_i32 : i32
    %4 = tpu.assume_multiple %3, 8 : i32
    %5 = arith.index_cast %4 : i32 to index
    %c0 = arith.constant 0 : index
    %6 = vector.load %arg3[%5, %c0] : memref<32x128xf32, #tpu.memory_space<vmem>>, vector<1x128xf32>
    %c0_1 = arith.constant 0 : index
    %c0_2 = arith.constant 0 : index
    %7 = vector.load %arg12[%c0_1, %c0_2] : memref<8x128xf32, #tpu.memory_space<vmem>>, vector<8x128xf32>
    %8 = vector.broadcast %6 : vector<1x128xf32> to vector<8x128xf32>
    %9 = arith.addf %7, %8 : vector<8x128xf32>
    %cst = arith.constant 0.000000e+00 : f32
    %10 = vector.broadcast %cst : f32 to vector<8x128xf32>
    %11 = arith.cmpf ogt, %9, %10 : vector<8x128xf32>
    %cst_3 = arith.constant 2.000000e-01 : f32
    %12 = vector.broadcast %cst_3 : f32 to vector<8x128xf32>
    %13 = arith.mulf %12, %9 : vector<8x128xf32>
    %14 = arith.select %11, %9, %13 : vector<8x128xi1>, vector<8x128xf32>
    %c0_4 = arith.constant 0 : index
    %c0_5 = arith.constant 0 : index
    %15 = vector.load %arg5[%c0_4, %c0_5] : memref<128x128xf32, #tpu.memory_space<vmem>>, vector<128x128xf32>
    %cst_6 = arith.constant dense<0.000000e+00> : vector<8x128xf32>
    %16 = tpu.matmul %14, %15, %cst_6 {dimension_numbers = #tpu.dot_dimension_numbers<[1], [0], [0], [1], [0, 0, 1, 1], [], []>} : vector<8x128xf32>, vector<128x128xf32>, vector<8x128xf32> -> vector<8x128xf32>
    %c0_7 = arith.constant 0 : index
    %c0_8 = arith.constant 0 : index
    %17 = vector.load %arg6[%c0_7, %c0_8] : memref<1x128xf32, #tpu.memory_space<vmem>>, vector<1x128xf32>
    %18 = vector.broadcast %17 : vector<1x128xf32> to vector<8x128xf32>
    %19 = arith.addf %16, %18 : vector<8x128xf32>
    %cst_9 = arith.constant 0.000000e+00 : f32
    %20 = vector.broadcast %cst_9 : f32 to vector<8x128xf32>
    %21 = arith.cmpf ogt, %19, %20 : vector<8x128xf32>
    %cst_10 = arith.constant 2.000000e-01 : f32
    %22 = vector.broadcast %cst_10 : f32 to vector<8x128xf32>
    %23 = arith.mulf %22, %19 : vector<8x128xf32>
    %24 = arith.select %21, %19, %23 : vector<8x128xi1>, vector<8x128xf32>
    %c0_11 = arith.constant 0 : index
    %c0_12 = arith.constant 0 : index
    %25 = vector.load %arg7[%c0_11, %c0_12] : memref<128x128xf32, #tpu.memory_space<vmem>>, vector<128x128xf32>
    %cst_13 = arith.constant dense<0.000000e+00> : vector<8x128xf32>
    %26 = tpu.matmul %24, %25, %cst_13 {dimension_numbers = #tpu.dot_dimension_numbers<[1], [0], [0], [1], [0, 0, 1, 1], [], []>} : vector<8x128xf32>, vector<128x128xf32>, vector<8x128xf32> -> vector<8x128xf32>
    %c0_14 = arith.constant 0 : index
    %c0_15 = arith.constant 0 : index
    %27 = vector.load %arg8[%c0_14, %c0_15] : memref<1x128xf32, #tpu.memory_space<vmem>>, vector<1x128xf32>
    %28 = vector.broadcast %27 : vector<1x128xf32> to vector<8x128xf32>
    %29 = arith.addf %26, %28 : vector<8x128xf32>
    %cst_16 = arith.constant 0.000000e+00 : f32
    %30 = vector.broadcast %cst_16 : f32 to vector<8x128xf32>
    %31 = arith.cmpf ogt, %29, %30 : vector<8x128xf32>
    %cst_17 = arith.constant 2.000000e-01 : f32
    %32 = vector.broadcast %cst_17 : f32 to vector<8x128xf32>
    %33 = arith.mulf %32, %29 : vector<8x128xf32>
    %34 = arith.select %31, %29, %33 : vector<8x128xi1>, vector<8x128xf32>
    %c0_18 = arith.constant 0 : index
    %c0_19 = arith.constant 0 : index
    %35 = vector.load %arg9[%c0_18, %c0_19] : memref<128x128xf32, #tpu.memory_space<vmem>>, vector<128x128xf32>
    %cst_20 = arith.constant dense<0.000000e+00> : vector<8x128xf32>
    %36 = tpu.matmul %34, %35, %cst_20 {dimension_numbers = #tpu.dot_dimension_numbers<[1], [0], [0], [1], [0, 0, 1, 1], [], []>} : vector<8x128xf32>, vector<128x128xf32>, vector<8x128xf32> -> vector<8x128xf32>
    %c0_21 = arith.constant 0 : index
    %c0_22 = arith.constant 0 : index
    %37 = vector.load %arg10[%c0_21, %c0_22] : memref<1x128xf32, #tpu.memory_space<vmem>>, vector<1x128xf32>
    %38 = vector.broadcast %37 : vector<1x128xf32> to vector<8x128xf32>
    %39 = arith.addf %36, %38 : vector<8x128xf32>
    %40 = tpu.iota {dimensions = array<i32: 1>} : vector<8x128xi32>
    %c8_i32_23 = arith.constant 8 : i32
    %41 = vector.broadcast %c8_i32_23 : i32 to vector<8x128xi32>
    %42 = arith.cmpi slt, %40, %41 : vector<8x128xi32>
    %cst_24 = arith.constant -1.000000e+30 : f32
    %43 = vector.broadcast %cst_24 : f32 to vector<8x128xf32>
    %44 = arith.select %42, %39, %43 : vector<8x128xi1>, vector<8x128xf32>
    %cst_25 = arith.constant dense<0xFF800000> : vector<8xf32>
    %45 = vector.multi_reduction <maximumf>, %44, %cst_25 [1] : vector<8x128xf32> to vector<8xf32>
    %46 = vector.shape_cast %45 : vector<8xf32> to vector<8x1xf32>
    %47 = vector.broadcast %46 : vector<8x1xf32> to vector<8x128xf32>
    %48 = arith.subf %44, %47 : vector<8x128xf32>
    %49 = math.exp %48 : vector<8x128xf32>
    %cst_26 = arith.constant dense<0.000000e+00> : vector<8xf32>
    %50 = vector.multi_reduction <add>, %49, %cst_26 [1] : vector<8x128xf32> to vector<8xf32>
    %51 = vector.shape_cast %50 : vector<8xf32> to vector<8x1xf32>
    %52 = tpu.reciprocal %51 {approx = true} : vector<8x1xf32> -> vector<8x1xf32>
    %53 = vector.broadcast %52 : vector<8x1xf32> to vector<8x128xf32>
    %54 = arith.mulf %49, %53 : vector<8x128xf32>
    %c0_27 = arith.constant 0 : index
    %c0_28 = arith.constant 0 : index
    %55 = vector.load %arg11[%c0_27, %c0_28] : memref<8x128xf32, #tpu.memory_space<vmem>>, vector<8x128xf32>
    tpu.vector_store %arg11[%c0_27, %c0_28], %54 {strides = array<i32>} : memref<8x128xf32, #tpu.memory_space<vmem>>, vector<8x128xf32>,
    return
  }
  func.func @transform_0(%arg0: i32, %arg1: i32) -> (i32, i32) {
    %c0_i32 = arith.constant 0 : i32
    %c0_i32_0 = arith.constant 0 : i32
    return %arg0, %c0_i32 : i32, i32
  }
  func.func @transform_1(%arg0: i32, %arg1: i32) -> (i32, i32) {
    %c0_i32 = arith.constant 0 : i32
    %c0_i32_0 = arith.constant 0 : i32
    %c0_i32_1 = arith.constant 0 : i32
    return %c0_i32, %c0_i32_0 : i32, i32
  }
  func.func @transform_2(%arg0: i32, %arg1: i32) -> (i32, i32) {
    %c0_i32 = arith.constant 0 : i32
    %c0_i32_0 = arith.constant 0 : i32
    %c0_i32_1 = arith.constant 0 : i32
    return %c0_i32, %c0_i32_0 : i32, i32
  }
  func.func @transform_3(%arg0: i32, %arg1: i32) -> (i32, i32) {
    %c0_i32 = arith.constant 0 : i32
    %c0_i32_0 = arith.constant 0 : i32
    %c0_i32_1 = arith.constant 0 : i32
    return %c0_i32, %c0_i32_0 : i32, i32
  }
  func.func @transform_4(%arg0: i32, %arg1: i32) -> (i32, i32) {
    %c0_i32 = arith.constant 0 : i32
    %c0_i32_0 = arith.constant 0 : i32
    %c0_i32_1 = arith.constant 0 : i32
    return %c0_i32, %c0_i32_0 : i32, i32
  }
  func.func @transform_5(%arg0: i32, %arg1: i32) -> (i32, i32) {
    %c0_i32 = arith.constant 0 : i32
    %c0_i32_0 = arith.constant 0 : i32
    %c0_i32_1 = arith.constant 0 : i32
    return %c0_i32, %c0_i32_0 : i32, i32
  }
  func.func @transform_6(%arg0: i32, %arg1: i32) -> (i32, i32) {
    %c0_i32 = arith.constant 0 : i32
    %c0_i32_0 = arith.constant 0 : i32
    %c0_i32_1 = arith.constant 0 : i32
    return %c0_i32, %c0_i32_0 : i32, i32
  }
  func.func @transform_7(%arg0: i32, %arg1: i32) -> (i32, i32) {
    %c0_i32 = arith.constant 0 : i32
    %c0_i32_0 = arith.constant 0 : i32
    %c0_i32_1 = arith.constant 0 : i32
    return %c0_i32, %c0_i32_0 : i32, i32
  }
  func.func @transform_8(%arg0: i32, %arg1: i32) -> (i32, i32) {
    %c0_i32 = arith.constant 0 : i32
    %c0_i32_0 = arith.constant 0 : i32
    %c0_i32_1 = arith.constant 0 : i32
    return %c0_i32, %c0_i32_0 : i32, i32
  }
  func.func @transform_9(%arg0: i32, %arg1: i32) -> (i32, i32) {
    %c0_i32 = arith.constant 0 : i32
    return %arg0, %arg1 : i32, i32
  }
}

module attributes {stable_mosaic.version = 11 : i64} {
  func.func @_mlp_softmax_kernel(%arg0: i32, %arg1: i32, %arg2: memref<8x128xf32, #tpu.memory_space<vmem>>, %arg3: memref<32x128xf32, #tpu.memory_space<vmem>>, %arg4: memref<128x128xf32, #tpu.memory_space<vmem>>, %arg5: memref<128x128xf32, #tpu.memory_space<vmem>>, %arg6: memref<1x128xf32, #tpu.memory_space<vmem>>, %arg7: memref<128x128xf32, #tpu.memory_space<vmem>>, %arg8: memref<1x128xf32, #tpu.memory_space<vmem>>, %arg9: memref<128x128xf32, #tpu.memory_space<vmem>>, %arg10: memref<1x128xf32, #tpu.memory_space<vmem>>, %arg11: memref<8x128xf32, #tpu.memory_space<vmem>>, %arg12: memref<8x128xf32, #tpu.memory_space<vmem>>) attributes {dimension_semantics = [#tpu.dimension_semantics<parallel>, #tpu.dimension_semantics<arbitrary>], iteration_bounds = array<i64: 1, 4>, scalar_prefetch = 0 : i64, scratch_operands = 1 : i64, tpu.core_type = #tpu.core_type<tc>, window_params = [{transform_indices = @transform_0, window_bounds = array<i64: 8, 128>}, {pipeline_mode = #tpu.pipeline_mode<synchronous>, transform_indices = @transform_1, window_bounds = array<i64: 32, 128>}, {pipeline_mode = #tpu.pipeline_mode<synchronous>, transform_indices = @transform_2, window_bounds = array<i64: 128, 128>}, {pipeline_mode = #tpu.pipeline_mode<synchronous>, transform_indices = @transform_3, window_bounds = array<i64: 128, 128>}, {pipeline_mode = #tpu.pipeline_mode<synchronous>, transform_indices = @transform_4, window_bounds = array<i64: 1, 128>}, {pipeline_mode = #tpu.pipeline_mode<synchronous>, transform_indices = @transform_5, window_bounds = array<i64: 128, 128>}, {pipeline_mode = #tpu.pipeline_mode<synchronous>, transform_indices = @transform_6, window_bounds = array<i64: 1, 128>}, {pipeline_mode = #tpu.pipeline_mode<synchronous>, transform_indices = @transform_7, window_bounds = array<i64: 128, 128>}, {pipeline_mode = #tpu.pipeline_mode<synchronous>, transform_indices = @transform_8, window_bounds = array<i64: 1, 128>}, {transform_indices = @transform_9, window_bounds = array<i64: 8, 128>}]} {
    %c0_i32 = arith.constant 0 : i32
    %0 = arith.cmpi eq, %arg1, %c0_i32 : i32
    %1 = arith.extui %0 : i1 to i32
    %c0_i32_0 = arith.constant 0 : i32
    %2 = arith.cmpi ne, %1, %c0_i32_0 : i32
    scf.if %2 {
      %c0_29 = arith.constant 0 : index
      %c0_30 = arith.constant 0 : index
      %56 = vector.load %arg2[%c0_29, %c0_30] : memref<8x128xf32, #tpu.memory_space<vmem>>, vector<8x128xf32>
      %c0_31 = arith.constant 0 : index
      %c0_32 = arith.constant 0 : index
      %57 = vector.load %arg4[%c0_31, %c0_32] : memref<128x128xf32, #tpu.memory_space<vmem>>, vector<128x128xf32>
      %cst_33 = arith.constant dense<0.000000e+00> : vector<8x128xf32>
      %58 = tpu.matmul %56, %57, %cst_33 {dimension_numbers = #tpu.dot_dimension_numbers<[1], [0], [0], [1], [0, 0, 1, 1], [], []>} : vector<8x128xf32>, vector<128x128xf32>, vector<8x128xf32> -> vector<8x128xf32>
      %c0_34 = arith.constant 0 : index
      %c0_35 = arith.constant 0 : index
      %59 = vector.load %arg12[%c0_34, %c0_35] : memref<8x128xf32, #tpu.memory_space<vmem>>, vector<8x128xf32>
      tpu.vector_store %arg12[%c0_34, %c0_35], %58 {strides = array<i32>} : memref<8x128xf32, #tpu.memory_space<vmem>>, vector<8x128xf32>,
    } else {
    }
    %c8_i32 = arith.constant 8 : i32
    %3 = arith.muli %arg1, %c8_i32 : i32
    %4 = tpu.assume_multiple %3, 8 : i32
    %5 = arith.index_cast %4 : i32 to index
    %c0 = arith.constant 0 : index
    %6 = vector.load %arg3[%5, %c0] : memref<32x128xf32, #tpu.memory_space<vmem>>, vector<1x128xf32>
    %c0_1 = arith.constant 0 : index
    %c0_2 = arith.constant 0 : index
    %7 = vector.load %arg12[%c0_1, %c0_2] : memref<8x128xf32, #tpu.memory_space<vmem>>, vector<8x128xf32>
    %8 = vector.broadcast %6 : vector<1x128xf32> to vector<8x128xf32>
    %9 = arith.addf %7, %8 : vector<8x128xf32>
    %cst = arith.constant 0.000000e+00 : f32
    %10 = vector.broadcast %cst : f32 to vector<8x128xf32>
    %11 = arith.cmpf ogt, %9, %10 : vector<8x128xf32>
    %cst_3 = arith.constant 2.000000e-01 : f32
    %12 = vector.broadcast %cst_3 : f32 to vector<8x128xf32>
    %13 = arith.mulf %12, %9 : vector<8x128xf32>
    %14 = arith.select %11, %9, %13 : vector<8x128xi1>, vector<8x128xf32>
    %c0_4 = arith.constant 0 : index
    %c0_5 = arith.constant 0 : index
    %15 = vector.load %arg5[%c0_4, %c0_5] : memref<128x128xf32, #tpu.memory_space<vmem>>, vector<128x128xf32>
    %cst_6 = arith.constant dense<0.000000e+00> : vector<8x128xf32>
    %16 = tpu.matmul %14, %15, %cst_6 {dimension_numbers = #tpu.dot_dimension_numbers<[1], [0], [0], [1], [0, 0, 1, 1], [], []>} : vector<8x128xf32>, vector<128x128xf32>, vector<8x128xf32> -> vector<8x128xf32>
    %c0_7 = arith.constant 0 : index
    %c0_8 = arith.constant 0 : index
    %17 = vector.load %arg6[%c0_7, %c0_8] : memref<1x128xf32, #tpu.memory_space<vmem>>, vector<1x128xf32>
    %18 = vector.broadcast %17 : vector<1x128xf32> to vector<8x128xf32>
    %19 = arith.addf %16, %18 : vector<8x128xf32>
    %cst_9 = arith.constant 0.000000e+00 : f32
    %20 = vector.broadcast %cst_9 : f32 to vector<8x128xf32>
    %21 = arith.cmpf ogt, %19, %20 : vector<8x128xf32>
    %cst_10 = arith.constant 2.000000e-01 : f32
    %22 = vector.broadcast %cst_10 : f32 to vector<8x128xf32>
    %23 = arith.mulf %22, %19 : vector<8x128xf32>
    %24 = arith.select %21, %19, %23 : vector<8x128xi1>, vector<8x128xf32>
    %c0_11 = arith.constant 0 : index
    %c0_12 = arith.constant 0 : index
    %25 = vector.load %arg7[%c0_11, %c0_12] : memref<128x128xf32, #tpu.memory_space<vmem>>, vector<128x128xf32>
    %cst_13 = arith.constant dense<0.000000e+00> : vector<8x128xf32>
    %26 = tpu.matmul %24, %25, %cst_13 {dimension_numbers = #tpu.dot_dimension_numbers<[1], [0], [0], [1], [0, 0, 1, 1], [], []>} : vector<8x128xf32>, vector<128x128xf32>, vector<8x128xf32> -> vector<8x128xf32>
    %c0_14 = arith.constant 0 : index
    %c0_15 = arith.constant 0 : index
    %27 = vector.load %arg8[%c0_14, %c0_15] : memref<1x128xf32, #tpu.memory_space<vmem>>, vector<1x128xf32>
    %28 = vector.broadcast %27 : vector<1x128xf32> to vector<8x128xf32>
    %29 = arith.addf %26, %28 : vector<8x128xf32>
    %cst_16 = arith.constant 0.000000e+00 : f32
    %30 = vector.broadcast %cst_16 : f32 to vector<8x128xf32>
    %31 = arith.cmpf ogt, %29, %30 : vector<8x128xf32>
    %cst_17 = arith.constant 2.000000e-01 : f32
    %32 = vector.broadcast %cst_17 : f32 to vector<8x128xf32>
    %33 = arith.mulf %32, %29 : vector<8x128xf32>
    %34 = arith.select %31, %29, %33 : vector<8x128xi1>, vector<8x128xf32>
    %c0_18 = arith.constant 0 : index
    %c0_19 = arith.constant 0 : index
    %35 = vector.load %arg9[%c0_18, %c0_19] : memref<128x128xf32, #tpu.memory_space<vmem>>, vector<128x128xf32>
    %cst_20 = arith.constant dense<0.000000e+00> : vector<8x128xf32>
    %36 = tpu.matmul %34, %35, %cst_20 {dimension_numbers = #tpu.dot_dimension_numbers<[1], [0], [0], [1], [0, 0, 1, 1], [], []>} : vector<8x128xf32>, vector<128x128xf32>, vector<8x128xf32> -> vector<8x128xf32>
    %c0_21 = arith.constant 0 : index
    %c0_22 = arith.constant 0 : index
    %37 = vector.load %arg10[%c0_21, %c0_22] : memref<1x128xf32, #tpu.memory_space<vmem>>, vector<1x128xf32>
    %38 = vector.broadcast %37 : vector<1x128xf32> to vector<8x128xf32>
    %39 = arith.addf %36, %38 : vector<8x128xf32>
    %40 = tpu.iota {dimensions = array<i32: 1>} : vector<8x128xi32>
    %c8_i32_23 = arith.constant 8 : i32
    %41 = vector.broadcast %c8_i32_23 : i32 to vector<8x128xi32>
    %42 = arith.cmpi slt, %40, %41 : vector<8x128xi32>
    %cst_24 = arith.constant -1.000000e+30 : f32
    %43 = vector.broadcast %cst_24 : f32 to vector<8x128xf32>
    %44 = arith.select %42, %39, %43 : vector<8x128xi1>, vector<8x128xf32>
    %cst_25 = arith.constant dense<0xFF800000> : vector<8xf32>
    %45 = vector.multi_reduction <maximumf>, %44, %cst_25 [1] : vector<8x128xf32> to vector<8xf32>
    %46 = vector.shape_cast %45 : vector<8xf32> to vector<8x1xf32>
    %47 = vector.broadcast %46 : vector<8x1xf32> to vector<8x128xf32>
    %48 = arith.subf %44, %47 : vector<8x128xf32>
    %49 = math.exp %48 : vector<8x128xf32>
    %cst_26 = arith.constant dense<0.000000e+00> : vector<8xf32>
    %50 = vector.multi_reduction <add>, %49, %cst_26 [1] : vector<8x128xf32> to vector<8xf32>
    %51 = vector.shape_cast %50 : vector<8xf32> to vector<8x1xf32>
    %52 = tpu.reciprocal %51 {approx = true} : vector<8x1xf32> -> vector<8x1xf32>
    %53 = vector.broadcast %52 : vector<8x1xf32> to vector<8x128xf32>
    %54 = arith.mulf %49, %53 : vector<8x128xf32>
    %c0_27 = arith.constant 0 : index
    %c0_28 = arith.constant 0 : index
    %55 = vector.load %arg11[%c0_27, %c0_28] : memref<8x128xf32, #tpu.memory_space<vmem>>, vector<8x128xf32>
    tpu.vector_store %arg11[%c0_27, %c0_28], %54 {strides = array<i32>} : memref<8x128xf32, #tpu.memory_space<vmem>>, vector<8x128xf32>,
    return
  }
  func.func @transform_0(%arg0: i32, %arg1: i32) -> (i32, i32) {
    %c0_i32 = arith.constant 0 : i32
    %c0_i32_0 = arith.constant 0 : i32
    return %arg0, %c0_i32 : i32, i32
  }
  func.func @transform_1(%arg0: i32, %arg1: i32) -> (i32, i32) {
    %c0_i32 = arith.constant 0 : i32
    %c0_i32_0 = arith.constant 0 : i32
    %c0_i32_1 = arith.constant 0 : i32
    return %c0_i32, %c0_i32_0 : i32, i32
  }
  func.func @transform_2(%arg0: i32, %arg1: i32) -> (i32, i32) {
    %c0_i32 = arith.constant 0 : i32
    %c0_i32_0 = arith.constant 0 : i32
    %c0_i32_1 = arith.constant 0 : i32
    return %c0_i32, %c0_i32_0 : i32, i32
  }
  func.func @transform_3(%arg0: i32, %arg1: i32) -> (i32, i32) {
    %c0_i32 = arith.constant 0 : i32
    %c0_i32_0 = arith.constant 0 : i32
    %c0_i32_1 = arith.constant 0 : i32
    return %c0_i32, %c0_i32_0 : i32, i32
  }
  func.func @transform_4(%arg0: i32, %arg1: i32) -> (i32, i32) {
    %c0_i32 = arith.constant 0 : i32
    %c0_i32_0 = arith.constant 0 : i32
    %c0_i32_1 = arith.constant 0 : i32
    return %c0_i32, %c0_i32_0 : i32, i32
  }
  func.func @transform_5(%arg0: i32, %arg1: i32) -> (i32, i32) {
    %c0_i32 = arith.constant 0 : i32
    %c0_i32_0 = arith.constant 0 : i32
    %c0_i32_1 = arith.constant 0 : i32
    return %c0_i32, %c0_i32_0 : i32, i32
  }
  func.func @transform_6(%arg0: i32, %arg1: i32) -> (i32, i32) {
    %c0_i32 = arith.constant 0 : i32
    %c0_i32_0 = arith.constant 0 : i32
    %c0_i32_1 = arith.constant 0 : i32
    return %c0_i32, %c0_i32_0 : i32, i32
  }
  func.func @transform_7(%arg0: i32, %arg1: i32) -> (i32, i32) {
    %c0_i32 = arith.constant 0 : i32
    %c0_i32_0 = arith.constant 0 : i32
    %c0_i32_1 = arith.constant 0 : i32
    return %c0_i32, %c0_i32_0 : i32, i32
  }
  func.func @transform_8(%arg0: i32, %arg1: i32) -> (i32, i32) {
    %c0_i32 = arith.constant 0 : i32
    %c0_i32_0 = arith.constant 0 : i32
    %c0_i32_1 = arith.constant 0 : i32
    return %c0_i32, %c0_i32_0 : i32, i32
  }
  func.func @transform_9(%arg0: i32, %arg1: i32) -> (i32, i32) {
    %c0_i32 = arith.constant 0 : i32
    return %arg0, %arg1 : i32, i32
  }
}

</mosaic_0001>

<llo_original>
// kernel: tpu_custom_call.1
$region0: #{tpu_custom_call.1}
  #allocation0 [shape = 'u32[]', space=smem, size = 0x4, offset = 0x4, fixed_abs, tag = 'smem constant byte address 0x4 - core index']
  #allocation1 [shape = 'u32[144,128]{1,0:T(1,128)}', space=vmem, size = 0x12000, scoped, tag = 'internal scratch']
  #allocation2 [shape = 'f32[8,128]{1,0:T(8,128)}', space=vmem, size = 0x1000, scoped, tag = 'scratch operand']
  %s0 = inlined_call_operand.hbm [shape: f32[8,128], index: 0, kind: input, shape index: {}]
  %s1 = inlined_call_operand.hbm [shape: f32[32,128], index: 1, kind: input, shape index: {}]
  %s2 = inlined_call_operand.hbm [shape: f32[128,128], index: 2, kind: input, shape index: {}]
  %s3 = inlined_call_operand.hbm [shape: f32[128,128], index: 3, kind: input, shape index: {}]
  %s4 = inlined_call_operand.vmem [shape: f32[1,128], index: 4, kind: input, shape index: {}]
  %s5 = inlined_call_operand.hbm [shape: f32[128,128], index: 5, kind: input, shape index: {}]
  %s6 = inlined_call_operand.vmem [shape: f32[1,128], index: 6, kind: input, shape index: {}]
  %s7 = inlined_call_operand.hbm [shape: f32[128,128], index: 7, kind: input, shape index: {}]
  %s8 = inlined_call_operand.vmem [shape: f32[1,128], index: 8, kind: input, shape index: {}]
  %s9 = inlined_call_operand.hbm [shape: f32[8,512], index: 9, kind: output, shape index: {}]
  %s10 = sld [smem:[#allocation0]]
  $region97: #{tpu_custom_call.1} parent=0
    _
  %s12 = ssub.s32 1, %s10
  %s13 = scalar_select 0, %s12, %s10
  $region1: #{tpu_custom_call.1} parent=0
    #allocation3 [shape = 'u8[4096]{0}', space=vmem, size = 0x1000, scoped, tag = 'input window, operand 0, single buffered']
    #allocation4 [shape = 's32[2]{0}', space=sflag, size = 0x8, scoped, tag = 'scoped memory for tpu_custom_call.1']
    #allocation5 [shape = 's32[2]{0}', space=sflag, size = 0x8, scoped, tag = 'scoped memory for tpu_custom_call.1']
    #allocation6 [shape = 'u8[16384]{0}', space=vmem, size = 0x4000, scoped, tag = 'input window, operand 1, single buffered']
    #allocation7 [shape = 's32[1]{0}', space=sflag, size = 0x4, scoped, tag = 'scoped memory for tpu_custom_call.1']
    #allocation8 [shape = 'u8[65536]{0}', space=vmem, size = 0x10000, scoped, tag = 'input window, operand 2, single buffered']
    #allocation9 [shape = 'u8[65536]{0}', space=vmem, size = 0x10000, scoped, tag = 'input window, operand 3, single buffered']
    #allocation10 [shape = 's32[1]{0}', space=sflag, size = 0x4, scoped, tag = 'scoped memory for tpu_custom_call.1']
    #allocation11 [shape = 'u8[65536]{0}', space=vmem, size = 0x10000, scoped, tag = 'input window, operand 5, single buffered']
    #allocation12 [shape = 'u8[65536]{0}', space=vmem, size = 0x10000, scoped, tag = 'input window, operand 7, single buffered']
    #allocation13 [shape = 's32[1]{0}', space=sflag, size = 0x4, scoped, tag = 'scoped memory for tpu_custom_call.1']
    #allocation14 [shape = 'u8[8192]{0}', space=vmem, size = 0x2000, scoped, tag = 'output window, operand 0']
    %14 = vsyncpa [#allocation4], 0
    %15 = vsyncpa [#allocation7], 0
    %16 = vsyncpa [#allocation10], 0
    %17 = vsyncpa [#allocation13], 0
    %18 = vsyncpa [#allocation5], 0
    %s19 = scalar_lea.sflag [#allocation5], 1
    %20 = vsyncpa %s19, 0
    loop: start=0, step=1, limit=6
    $region2: #{tpu_custom_call.1} parent=1 // loop_pre_header
      _
    $region3: #{tpu_custom_call.1} parent=1 // loop_header
      %s22 = sphi 0, %s26
      %p23 = scmp.ge.s32.totalorder %s22, 6
      %s29 = sphi 0, %s41
      %s30 = sphi 0, %s37
      %s31 = sphi 0, %s29
      %s32 = sphi 0, %s30
      %s33 = sphi 0, %s31
      %s34 = sphi 0, %s32
      %s44 = sphi 0, %s46
      %s47 = sphi 0, %s44
      %s48 = sphi 0, %s47
      %s64 = sphi 0, %s48
      %s68 = sphi 0, %s68
      %s70 = sphi 0, %s68
      %s71 = sphi 0, %s70
      %s85 = sphi 0, %s71
      %s89 = sphi 0, %s89
      %s91 = sphi 0, %s89
      %s92 = sphi 0, %s91
      %s106 = sphi 0, %s92
      %s110 = sphi 0, %s110
      %s112 = sphi 0, %s110
      %s113 = sphi 0, %s112
      %s127 = sphi 0, %s113
      %s131 = sphi 0, %s131
      %s133 = sphi 0, %s131
      %s134 = sphi 0, %s133
      %s148 = sphi 0, %s134
      %s152 = sphi 0, %s152
      %s154 = sphi 0, %s152
      %s155 = sphi 0, %s154
      %s169 = sphi 0, %s155
      %s173 = sphi 0, %s173
      %s175 = sphi 0, %s173
      %s176 = sphi 0, %s175
      %s190 = sphi 0, %s176
      %s194 = sphi 0, %s194
      %s196 = sphi 0, %s194
      %s197 = sphi 0, %s196
      %s211 = sphi 0, %s197
      %s215 = sphi 0, %s215
      %s217 = sphi 0, %s215
      %s218 = sphi 0, %s217
      %s232 = sphi 0, %s218
      %s240 = sphi 0, %s242
      %s243 = sphi 0, %s240
      %s244 = sphi 0, %s243
      %s260 = sphi 0, %s244
    $region4: #{tpu_custom_call.1} parent=1 // loop_header_branch
      %25 = sbr.rel (%p23) target = $region8
    $region5: #{tpu_custom_call.1} parent=1 // loop_body
      %s27 = ssub.s32 %s22, 1
      %s28 = ssub.s32 %s22, 2
      %s35 = sadd.s32 1, %s30
      %p36 = scmp.ge.s32.totalorder %s35, 4
      %s37 = scalar_select %p36, 0, %s35
      %s38 = sadd.s32 1, %s29
      %s39 = scalar_select %p36, %s38, %s29
      %p40 = scmp.ge.s32.totalorder %s39, 1
      %s41 = scalar_select %p40, 0, %s39
      %s42 = ssub.s32 %s29, %s41
      %p43 = scmp.eq.s32.totalorder %s42, 0
      %s45 = sadd.s32 %s44, 1
      %s46 = scalar_select %p43, %s44, %s45
      %p49 = pneg %p43
      %p50 = scmp.eq.s32.totalorder %s22, 3
      %p51 = por %p49, %p50
      %p52 = scmp.ne.s32.totalorder %s44, %s47
      %p53 = scmp.eq.s32.totalorder %s22, 0
      %p54 = por %p52, %p53
      %p55 = scmp.ne.s32.totalorder %s44, %s47
      %p56 = scmp.eq.s32.totalorder %s27, 3
      %p57 = por %p55, %p56
      %p58 = scmp.ne.s32.totalorder %s47, %s48
      %p59 = scmp.eq.s32.totalorder %s27, 0
      %p60 = por %p58, %p59
      %p61 = scmp.ne.s32.totalorder %s47, %s48
      %p62 = scmp.eq.s32.totalorder %s28, 3
      %p63 = por %p61, %p62
      %p65 = scmp.ne.s32.totalorder %s48, %s64
      %p66 = scmp.eq.s32.totalorder %s28, 0
      %p67 = por %p65, %p66
      %s69 = sadd.s32 %s68, 1
      %p72 = scmp.eq.s32.totalorder %s22, 3
      %p73 = scmp.ne.s32.totalorder %s68, %s70
      %p74 = scmp.eq.s32.totalorder %s22, 0
      %p75 = por %p73, %p74
      %p76 = scmp.ne.s32.totalorder %s68, %s70
      %p77 = scmp.eq.s32.totalorder %s27, 3
      %p78 = por %p76, %p77
      %p79 = scmp.ne.s32.totalorder %s70, %s71
      %p80 = scmp.eq.s32.totalorder %s27, 0
      %p81 = por %p79, %p80
      %p82 = scmp.ne.s32.totalorder %s70, %s71
      %p83 = scmp.eq.s32.totalorder %s28, 3
      %p84 = por %p82, %p83
      %p86 = scmp.ne.s32.totalorder %s71, %s85
      %p87 = scmp.eq.s32.totalorder %s28, 0
      %p88 = por %p86, %p87
      %s90 = sadd.s32 %s89, 1
      %p93 = scmp.eq.s32.totalorder %s22, 3
      %p94 = scmp.ne.s32.totalorder %s89, %s91
      %p95 = scmp.eq.s32.totalorder %s22, 0
      %p96 = por %p94, %p95
      %p97 = scmp.ne.s32.totalorder %s89, %s91
      %p98 = scmp.eq.s32.totalorder %s27, 3
      %p99 = por %p97, %p98
      %p100 = scmp.ne.s32.totalorder %s91, %s92
      %p101 = scmp.eq.s32.totalorder %s27, 0
      %p102 = por %p100, %p101
      %p103 = scmp.ne.s32.totalorder %s91, %s92
      %p104 = scmp.eq.s32.totalorder %s28, 3
      %p105 = por %p103, %p104
      %p107 = scmp.ne.s32.totalorder %s92, %s106
      %p108 = scmp.eq.s32.totalorder %s28, 0
      %p109 = por %p107, %p108
      %s111 = sadd.s32 %s110, 1
      %p114 = scmp.eq.s32.totalorder %s22, 3
      %p115 = scmp.ne.s32.totalorder %s110, %s112
      %p116 = scmp.eq.s32.totalorder %s22, 0
      %p117 = por %p115, %p116
      %p118 = scmp.ne.s32.totalorder %s110, %s112
      %p119 = scmp.eq.s32.totalorder %s27, 3
      %p120 = por %p118, %p119
      %p121 = scmp.ne.s32.totalorder %s112, %s113
      %p122 = scmp.eq.s32.totalorder %s27, 0
      %p123 = por %p121, %p122
      %p124 = scmp.ne.s32.totalorder %s112, %s113
      %p125 = scmp.eq.s32.totalorder %s28, 3
      %p126 = por %p124, %p125
      %p128 = scmp.ne.s32.totalorder %s113, %s127
      %p129 = scmp.eq.s32.totalorder %s28, 0
      %p130 = por %p128, %p129
      %s132 = sadd.s32 %s131, 1
      %p135 = scmp.eq.s32.totalorder %s22, 3
      %p136 = scmp.ne.s32.totalorder %s131, %s133
      %p137 = scmp.eq.s32.totalorder %s22, 0
      %p138 = por %p136, %p137
      %p139 = scmp.ne.s32.totalorder %s131, %s133
      %p140 = scmp.eq.s32.totalorder %s27, 3
      %p141 = por %p139, %p140
      %p142 = scmp.ne.s32.totalorder %s133, %s134
      %p143 = scmp.eq.s32.totalorder %s27, 0
      %p144 = por %p142, %p143
      %p145 = scmp.ne.s32.totalorder %s133, %s134
      %p146 = scmp.eq.s32.totalorder %s28, 3
      %p147 = por %p145, %p146
      %p149 = scmp.ne.s32.totalorder %s134, %s148
      %p150 = scmp.eq.s32.totalorder %s28, 0
      %p151 = por %p149, %p150
      %s153 = sadd.s32 %s152, 1
      %p156 = scmp.eq.s32.totalorder %s22, 3
      %p157 = scmp.ne.s32.totalorder %s152, %s154
      %p158 = scmp.eq.s32.totalorder %s22, 0
      %p159 = por %p157, %p158
      %p160 = scmp.ne.s32.totalorder %s152, %s154
      %p161 = scmp.eq.s32.totalorder %s27, 3
      %p162 = por %p160, %p161
      %p163 = scmp.ne.s32.totalorder %s154, %s155
      %p164 = scmp.eq.s32.totalorder %s27, 0
      %p165 = por %p163, %p164
      %p166 = scmp.ne.s32.totalorder %s154, %s155
      %p167 = scmp.eq.s32.totalorder %s28, 3
      %p168 = por %p166, %p167
      %p170 = scmp.ne.s32.totalorder %s155, %s169
      %p171 = scmp.eq.s32.totalorder %s28, 0
      %p172 = por %p170, %p171
      %s174 = sadd.s32 %s173, 1
      %p177 = scmp.eq.s32.totalorder %s22, 3
      %p178 = scmp.ne.s32.totalorder %s173, %s175
      %p179 = scmp.eq.s32.totalorder %s22, 0
      %p180 = por %p178, %p179
      %p181 = scmp.ne.s32.totalorder %s173, %s175
      %p182 = scmp.eq.s32.totalorder %s27, 3
      %p183 = por %p181, %p182
      %p184 = scmp.ne.s32.totalorder %s175, %s176
      %p185 = scmp.eq.s32.totalorder %s27, 0
      %p186 = por %p184, %p185
      %p187 = scmp.ne.s32.totalorder %s175, %s176
      %p188 = scmp.eq.s32.totalorder %s28, 3
      %p189 = por %p187, %p188
      %p191 = scmp.ne.s32.totalorder %s176, %s190
      %p192 = scmp.eq.s32.totalorder %s28, 0
      %p193 = por %p191, %p192
      %s195 = sadd.s32 %s194, 1
      %p198 = scmp.eq.s32.totalorder %s22, 3
      %p199 = scmp.ne.s32.totalorder %s194, %s196
      %p200 = scmp.eq.s32.totalorder %s22, 0
      %p201 = por %p199, %p200
      %p202 = scmp.ne.s32.totalorder %s194, %s196
      %p203 = scmp.eq.s32.totalorder %s27, 3
      %p204 = por %p202, %p203
      %p205 = scmp.ne.s32.totalorder %s196, %s197
      %p206 = scmp.eq.s32.totalorder %s27, 0
      %p207 = por %p205, %p206
      %p208 = scmp.ne.s32.totalorder %s196, %s197
      %p209 = scmp.eq.s32.totalorder %s28, 3
      %p210 = por %p208, %p209
      %p212 = scmp.ne.s32.totalorder %s197, %s211
      %p213 = scmp.eq.s32.totalorder %s28, 0
      %p214 = por %p212, %p213
      %s216 = sadd.s32 %s215, 1
      %p219 = scmp.eq.s32.totalorder %s22, 3
      %p220 = scmp.ne.s32.totalorder %s215, %s217
      %p221 = scmp.eq.s32.totalorder %s22, 0
      %p222 = por %p220, %p221
      %p223 = scmp.ne.s32.totalorder %s215, %s217
      %p224 = scmp.eq.s32.totalorder %s27, 3
      %p225 = por %p223, %p224
      %p226 = scmp.ne.s32.totalorder %s217, %s218
      %p227 = scmp.eq.s32.totalorder %s27, 0
      %p228 = por %p226, %p227
      %p229 = scmp.ne.s32.totalorder %s217, %s218
      %p230 = scmp.eq.s32.totalorder %s28, 3
      %p231 = por %p229, %p230
      %p233 = scmp.ne.s32.totalorder %s218, %s232
      %p234 = scmp.eq.s32.totalorder %s28, 0
      %p235 = por %p233, %p234
      %s236 = ssub.s32 %s29, %s41
      %s237 = ssub.s32 %s30, %s37
      %s238 = sor.u32 %s236, %s237
      %p239 = scmp.eq.s32.totalorder %s238, 0
      %s241 = sadd.s32 %s240, 1
      %s242 = scalar_select %p239, %s240, %s241
      %p245 = pneg %p239
      %p246 = scmp.eq.s32.totalorder %s22, 3
      %p247 = por %p245, %p246
      %p248 = scmp.ne.s32.totalorder %s240, %s243
      %p249 = scmp.eq.s32.totalorder %s22, 0
      %p250 = por %p248, %p249
      %p251 = scmp.ne.s32.totalorder %s240, %s243
      %p252 = scmp.eq.s32.totalorder %s27, 3
      %p253 = por %p251, %p252
      %p254 = scmp.ne.s32.totalorder %s243, %s244
      %p255 = scmp.eq.s32.totalorder %s27, 0
      %p256 = por %p254, %p255
      %p257 = scmp.ne.s32.totalorder %s243, %s244
      %p258 = scmp.eq.s32.totalorder %s28, 3
      %p259 = por %p257, %p258
      %p261 = scmp.ne.s32.totalorder %s244, %s260
      %p262 = scmp.eq.s32.totalorder %s28, 0
      %p263 = por %p261, %p262
      %p264 = scmp.le.s32.totalorder 1, %s22
      %p265 = scmp.lt.s32.totalorder %s22, 5
      %p266 = pnand %p264, %p265
      %p267 = pneg %p266
      // Predicated region
      $region9: #{tpu_custom_call.1} parent=5 // pred_check
        _
      $region10: #{tpu_custom_call.1} parent=5 // pred_check_branch
        %269 = sbr.rel (%p266) target = $region12
      $region11: #{tpu_custom_call.1} parent=5 // pred_region
        %s270 = ssub.s32 %s22, 1
        // Predicated region
        $region13: #{tpu_custom_call.1} parent=11 // pred_check
          %p271 = pneg %p60
        $region14: #{tpu_custom_call.1} parent=11 // pred_check_branch
          %273 = sbr.rel (%p271) target = $region16
        $region15: #{tpu_custom_call.1} parent=11 // pred_region
          %s275 = ssub.s32 128, 128
          %276 = vsyncadd [#allocation4], %s275
          %s277 = smul.addr %s31, 128
          %s278 = scalar_lea.hbm %s0, %s277
          %s280 = sshll.u32 [#allocation3], 4
          %s281 = int_to_ptr.vmem [resolvable:$true] %s280
          %283 = dma.hbm_to_vmem [thread:$0]  %s278, 128, %s281, [#allocation4]
        $region16: #{tpu_custom_call.1} parent=11 // pred_fallthru
          _
        // Predicated region
        $region17: #{tpu_custom_call.1} parent=11 // pred_check
          %p284 = pneg %p81
        $region18: #{tpu_custom_call.1} parent=11 // pred_check_branch
          %286 = sbr.rel (%p284) target = $region20
        $region19: #{tpu_custom_call.1} parent=11 // pred_region
          %s288 = ssub.s32 512, 512
          %289 = vsyncadd [#allocation7], %s288
          %s290 = sshll.u32 [#allocation6], 4
          %s291 = int_to_ptr.vmem [resolvable:$true] %s290
          %296 = dma.hbm_to_vmem [thread:$0]  %s1, 512, %s291, [#allocation7], 128, 128, 8
        $region20: #{tpu_custom_call.1} parent=11 // pred_fallthru
          _
        // Predicated region
        $region21: #{tpu_custom_call.1} parent=11 // pred_check
          %p297 = pneg %p102
        $region22: #{tpu_custom_call.1} parent=11 // pred_check_branch
          %299 = sbr.rel (%p297) target = $region24
        $region23: #{tpu_custom_call.1} parent=11 // pred_region
          %s301 = ssub.s32 2048, 2048
          %302 = vsyncadd [#allocation7], %s301
          %s303 = sshll.u32 [#allocation8], 4
          %s304 = int_to_ptr.vmem [resolvable:$true] %s303
          %309 = dma.hbm_to_vmem [thread:$0]  %s2, 2048, %s304, [#allocation7], 128, 128, 8
        $region24: #{tpu_custom_call.1} parent=11 // pred_fallthru
          _
        // Predicated region
        $region25: #{tpu_custom_call.1} parent=11 // pred_check
          %p310 = pneg %p123
        $region26: #{tpu_custom_call.1} parent=11 // pred_check_branch
          %312 = sbr.rel (%p310) target = $region28
        $region27: #{tpu_custom_call.1} parent=11 // pred_region
          %s314 = ssub.s32 2048, 2048
          %315 = vsyncadd [#allocation10], %s314
          %s316 = sshll.u32 [#allocation9], 4
          %s317 = int_to_ptr.vmem [resolvable:$true] %s316
          %322 = dma.hbm_to_vmem [thread:$0]  %s3, 2048, %s317, [#allocation10], 128, 128, 8
        $region28: #{tpu_custom_call.1} parent=11 // pred_fallthru
          _
        // Predicated region
        $region29: #{tpu_custom_call.1} parent=11 // pred_check
          %p323 = pneg %p144
        $region30: #{tpu_custom_call.1} parent=11 // pred_check_branch
          %325 = sbr.rel (%p323) target = $region32
        $region31: #{tpu_custom_call.1} parent=11 // pred_region
          _
        $region32: #{tpu_custom_call.1} parent=11 // pred_fallthru
          _
        // Predicated region
        $region33: #{tpu_custom_call.1} parent=11 // pred_check
          %p326 = pneg %p165
        $region34: #{tpu_custom_call.1} parent=11 // pred_check_branch
          %328 = sbr.rel (%p326) target = $region36
        $region35: #{tpu_custom_call.1} parent=11 // pred_region
          %s330 = ssub.s32 2048, 2048
          %331 = vsyncadd [#allocation10], %s330
          %s332 = sshll.u32 [#allocation11], 4
          %s333 = int_to_ptr.vmem [resolvable:$true] %s332
          %338 = dma.hbm_to_vmem [thread:$0]  %s5, 2048, %s333, [#allocation10], 128, 128, 8
        $region36: #{tpu_custom_call.1} parent=11 // pred_fallthru
          _
        // Predicated region
        $region37: #{tpu_custom_call.1} parent=11 // pred_check
          %p339 = pneg %p186
        $region38: #{tpu_custom_call.1} parent=11 // pred_check_branch
          %341 = sbr.rel (%p339) target = $region40
        $region39: #{tpu_custom_call.1} parent=11 // pred_region
          _
        $region40: #{tpu_custom_call.1} parent=11 // pred_fallthru
          _
        // Predicated region
        $region41: #{tpu_custom_call.1} parent=11 // pred_check
          %p342 = pneg %p207
        $region42: #{tpu_custom_call.1} parent=11 // pred_check_branch
          %344 = sbr.rel (%p342) target = $region44
        $region43: #{tpu_custom_call.1} parent=11 // pred_region
          %s346 = ssub.s32 2048, 2048
          %347 = vsyncadd [#allocation13], %s346
          %s348 = sshll.u32 [#allocation12], 4
          %s349 = int_to_ptr.vmem [resolvable:$true] %s348
          %354 = dma.hbm_to_vmem [thread:$0]  %s7, 2048, %s349, [#allocation13], 128, 128, 8
        $region44: #{tpu_custom_call.1} parent=11 // pred_fallthru
          _
        // Predicated region
        $region45: #{tpu_custom_call.1} parent=11 // pred_check
          %p355 = pneg %p228
        $region46: #{tpu_custom_call.1} parent=11 // pred_check_branch
          %357 = sbr.rel (%p355) target = $region48
        $region47: #{tpu_custom_call.1} parent=11 // pred_region
          _
        $region48: #{tpu_custom_call.1} parent=11 // pred_fallthru
          _
      $region12: #{tpu_custom_call.1} parent=5 // pred_fallthru
        _
      %p358 = scmp.lt.s32.totalorder %s22, 4
      // Predicated region
      $region49: #{tpu_custom_call.1} parent=5 // pred_check
        %p359 = pneg %p358
      $region50: #{tpu_custom_call.1} parent=5 // pred_check_branch
        %361 = sbr.rel (%p359) target = $region52
      $region51: #{tpu_custom_call.1} parent=5 // pred_region
        _
      $region52: #{tpu_custom_call.1} parent=5 // pred_fallthru
        _
      %p362 = scmp.le.s32.totalorder 1, %s22
      %p363 = scmp.lt.s32.totalorder %s22, 5
      %p364 = pnand %p362, %p363
      %p365 = pneg %p364
      // Predicated region
      $region53: #{tpu_custom_call.1} parent=5 // pred_check
        _
      $region54: #{tpu_custom_call.1} parent=5 // pred_check_branch
        %367 = sbr.rel (%p364) target = $region56
      $region55: #{tpu_custom_call.1} parent=5 // pred_region
        %s368 = ssub.s32 %s22, 1
        // Predicated region
        $region57: #{tpu_custom_call.1} parent=55 // pred_check
          %p369 = pneg %p60
        $region58: #{tpu_custom_call.1} parent=55 // pred_check_branch
          %371 = sbr.rel (%p369) target = $region60
        $region59: #{tpu_custom_call.1} parent=55 // pred_region
          %372 = dma.done [#allocation4], 128
        $region60: #{tpu_custom_call.1} parent=55 // pred_fallthru
          _
        // Predicated region
        $region61: #{tpu_custom_call.1} parent=55 // pred_check
          %p373 = pneg %p81
        $region62: #{tpu_custom_call.1} parent=55 // pred_check_branch
          %375 = sbr.rel (%p373) target = $region64
        $region63: #{tpu_custom_call.1} parent=55 // pred_region
          %376 = dma.done [#allocation7], 512
        $region64: #{tpu_custom_call.1} parent=55 // pred_fallthru
          _
        // Predicated region
        $region65: #{tpu_custom_call.1} parent=55 // pred_check
          %p377 = pneg %p102
        $region66: #{tpu_custom_call.1} parent=55 // pred_check_branch
          %379 = sbr.rel (%p377) target = $region68
        $region67: #{tpu_custom_call.1} parent=55 // pred_region
          %380 = dma.done [#allocation7], 2048
        $region68: #{tpu_custom_call.1} parent=55 // pred_fallthru
          _
        // Predicated region
        $region69: #{tpu_custom_call.1} parent=55 // pred_check
          %p381 = pneg %p123
        $region70: #{tpu_custom_call.1} parent=55 // pred_check_branch
          %383 = sbr.rel (%p381) target = $region72
        $region71: #{tpu_custom_call.1} parent=55 // pred_region
          %384 = dma.done [#allocation10], 2048
        $region72: #{tpu_custom_call.1} parent=55 // pred_fallthru
          _
        // Predicated region
        $region73: #{tpu_custom_call.1} parent=55 // pred_check
          %p385 = pneg %p165
        $region74: #{tpu_custom_call.1} parent=55 // pred_check_branch
          %387 = sbr.rel (%p385) target = $region76
        $region75: #{tpu_custom_call.1} parent=55 // pred_region
          %388 = dma.done [#allocation10], 2048
        $region76: #{tpu_custom_call.1} parent=55 // pred_fallthru
          _
        // Predicated region
        $region77: #{tpu_custom_call.1} parent=55 // pred_check
          %p389 = pneg %p207
        $region78: #{tpu_custom_call.1} parent=55 // pred_check_branch
          %391 = sbr.rel (%p389) target = $region80
        $region79: #{tpu_custom_call.1} parent=55 // pred_region
          %392 = dma.done [#allocation13], 2048
        $region80: #{tpu_custom_call.1} parent=55 // pred_fallthru
          _
        %p393 = pneg %p60
        %p394 = pneg %p57
        %p395 = pneg %p81
        %p396 = pneg %p78
        %p397 = pneg %p102
        %p398 = pneg %p99
        %p399 = pneg %p123
        %p400 = pneg %p120
        %p401 = pneg %p144
        %p402 = pneg %p141
        %p403 = pneg %p165
        %p404 = pneg %p162
        %p405 = pneg %p186
        %p406 = pneg %p183
        %p407 = pneg %p207
        %p408 = pneg %p204
        %p409 = pneg %p228
        %p410 = pneg %p225
        %p411 = pneg %p256
        %p412 = pneg %p253
        %s413 = sand.u32 %s243, 1
        %s414 = scalar_lea.sflag [#allocation5], %s413
        %s415 = sand.u32 %s243, 1
        %s416 = smul.addr %s415, 8
        %s417 = scalar_lea.vmem [#allocation14], %s416
        %p418 = scmp.eq.s32.totalorder %s32, 0
        // Predicated region
        $region81: #{tpu_custom_call.1} parent=55 // pred_check
          %p419 = pneg %p418
        $region82: #{tpu_custom_call.1} parent=55 // pred_check_branch
          %421 = sbr.rel (%p419) target = $region84
        $region83: #{tpu_custom_call.1} parent=55 // pred_region
          %v422 = vld [vmem:[#allocation3] sm:$0xff]
          %v423 = vld [vmem:[#allocation8] sm:$0xff]
          %v424 = vld [vmem:[#allocation8 + $0x8] sm:$0xff]
          %v425 = vld [vmem:[#allocation8 + $0x10] sm:$0xff]
          %v426 = vld [vmem:[#allocation8 + $0x18] sm:$0xff]
          %v427 = vld [vmem:[#allocation8 + $0x20] sm:$0xff]
          %v428 = vld [vmem:[#allocation8 + $0x28] sm:$0xff]
          %v429 = vld [vmem:[#allocation8 + $0x30] sm:$0xff]
          %v430 = vld [vmem:[#allocation8 + $0x38] sm:$0xff]
          %v431 = vld [vmem:[#allocation8 + $0x40] sm:$0xff]
          %v432 = vld [vmem:[#allocation8 + $0x48] sm:$0xff]
          %v433 = vld [vmem:[#allocation8 + $0x50] sm:$0xff]
          %v434 = vld [vmem:[#allocation8 + $0x58] sm:$0xff]
          %v435 = vld [vmem:[#allocation8 + $0x60] sm:$0xff]
          %v436 = vld [vmem:[#allocation8 + $0x68] sm:$0xff]
          %v437 = vld [vmem:[#allocation8 + $0x70] sm:$0xff]
          %v438 = vld [vmem:[#allocation8 + $0x78] sm:$0xff]
          %439 = vmatprep.subr.mxu0 0.0
          %440 = vmatpush1.msra.mxu0 %v423
          %441 = vmatprep.subr.mxu0 0.0
          %442 = vmatpush1.msra.mxu0 %v424
          %443 = vmatprep.subr.mxu0 0.0
          %444 = vmatpush1.msra.mxu0 %v425
          %445 = vmatprep.subr.mxu0 0.0
          %446 = vmatpush1.msra.mxu0 %v426
          %447 = vmatprep.subr.mxu0 0.0
          %448 = vmatpush1.msra.mxu0 %v427
          %449 = vmatprep.subr.mxu0 0.0
          %450 = vmatpush1.msra.mxu0 %v428
          %451 = vmatprep.subr.mxu0 0.0
          %452 = vmatpush1.msra.mxu0 %v429
          %453 = vmatprep.subr.mxu0 0.0
          %454 = vmatpush1.msra.mxu0 %v430
          %455 = vmatprep.subr.mxu0 0.0
          %456 = vmatpush1.msra.mxu0 %v431
          %457 = vmatprep.subr.mxu0 0.0
          %458 = vmatpush1.msra.mxu0 %v432
          %459 = vmatprep.subr.mxu0 0.0
          %460 = vmatpush1.msra.mxu0 %v433
          %461 = vmatprep.subr.mxu0 0.0
          %462 = vmatpush1.msra.mxu0 %v434
          %463 = vmatprep.subr.mxu0 0.0
          %464 = vmatpush1.msra.mxu0 %v435
          %465 = vmatprep.subr.mxu0 0.0
          %466 = vmatpush1.msra.mxu0 %v436
          %467 = vmatprep.subr.mxu0 0.0
          %468 = vmatpush1.msra.mxu0 %v437
          %469 = vmatprep.subr.mxu0 0.0
          %470 = vmatpush1.msra.mxu0 %v438
          %471 = vmatprep.subr.mxu0 0.0
          %472 = vmatpush1.msra.mxu0 0.0
          %473 = vmatprep.subr.mxu0 0.0
          %474 = vmatpush1.msra.mxu0 0.0
          %475 = vmatprep.subr.mxu0 0.0
          %476 = vmatpush1.msra.mxu0 0.0
          %477 = vmatprep.subr.mxu0 0.0
          %478 = vmatpush1.msra.mxu0 0.0
          %479 = vmatprep.subr.mxu0 0.0
          %480 = vmatpush1.msra.mxu0 0.0
          %481 = vmatprep.subr.mxu0 0.0
          %482 = vmatpush1.msra.mxu0 0.0
          %483 = vmatprep.subr.mxu0 0.0
          %484 = vmatpush1.msra.mxu0 0.0
          %485 = vmatprep.subr.mxu0 0.0
          %486 = vmatpush1.msra.mxu0 0.0
          %487 = vmatprep.subr.mxu0 0.0
          %488 = vmatpush1.msra.mxu0 0.0
          %489 = vmatprep.subr.mxu0 0.0
          %490 = vmatpush1.msra.mxu0 0.0
          %491 = vmatprep.subr.mxu0 0.0
          %492 = vmatpush1.msra.mxu0 0.0
          %493 = vmatprep.subr.mxu0 0.0
          %494 = vmatpush1.msra.mxu0 0.0
          %495 = vmatprep.subr.mxu0 0.0
          %496 = vmatpush1.msra.mxu0 0.0
          %497 = vmatprep.subr.mxu0 0.0
          %498 = vmatpush1.msra.mxu0 0.0
          %499 = vmatprep.subr.mxu0 0.0
          %500 = vmatpush1.msra.mxu0 0.0
          %501 = vmatprep.subr.mxu0 0.0
          %502 = vmatpush1.msra.mxu0 0.0
          %503 = vmatprep.mubr.f32.mxu0 0.0
          %504 = vmatmul.mubr.f32.gmra.mrb[0].mxu0 %v422
          %v505 = vpop.f32.mrb[0].mxu0
          %v506 = vadd.f32 0.0, %v505
          %v507 = vpop.f32.mrb[0].mxu0
          %508 = vdwg.mxu0
          %509 = vst [vmem:[#allocation2] sm:$0xff] %v506
        $region84: #{tpu_custom_call.1} parent=55 // pred_fallthru
          _
        %s510 = smul.u32 %s32, 8
        %s511 = scalar_lea.vmem [#allocation6], %s510
        %v512 = vld [vmem:[%s511] sm:$0x1]
        %v513 = vld [vmem:[#allocation2] sm:$0xff]
        %v514 = vlaneseq
        %v515 = vshrl.u32 %v514, 7
        %v516 = vsub.s32 0, %v515
        %v517 = vrot.slane %v512, %v516
        %v518 = vadd.f32 %v513, %v517
        %vm519 = vcmp.gt.f32.partialorder %v518, 0.0
        %v520 = vmul.f32 %v518, 0.2
        %v521 = vsel %vm519, %v518, %v520
        %v522 = vld [vmem:[#allocation9] sm:$0xff]
        %v523 = vld [vmem:[#allocation9 + $0x8] sm:$0xff]
        %v524 = vld [vmem:[#allocation9 + $0x10] sm:$0xff]
        %v525 = vld [vmem:[#allocation9 + $0x18] sm:$0xff]
        %v526 = vld [vmem:[#allocation9 + $0x20] sm:$0xff]
        %v527 = vld [vmem:[#allocation9 + $0x28] sm:$0xff]
        %v528 = vld [vmem:[#allocation9 + $0x30] sm:$0xff]
        %v529 = vld [vmem:[#allocation9 + $0x38] sm:$0xff]
        %v530 = vld [vmem:[#allocation9 + $0x40] sm:$0xff]
        %v531 = vld [vmem:[#allocation9 + $0x48] sm:$0xff]
        %v532 = vld [vmem:[#allocation9 + $0x50] sm:$0xff]
        %v533 = vld [vmem:[#allocation9 + $0x58] sm:$0xff]
        %v534 = vld [vmem:[#allocation9 + $0x60] sm:$0xff]
        %v535 = vld [vmem:[#allocation9 + $0x68] sm:$0xff]
        %v536 = vld [vmem:[#allocation9 + $0x70] sm:$0xff]
        %v537 = vld [vmem:[#allocation9 + $0x78] sm:$0xff]
        %v538 = vld [vmem:[%s4] sm:$0x1]
        %v540 = vlaneseq
        %v541 = vshrl.u32 %v540, 7
        %v542 = vsub.s32 0, %v541
        %v543 = vrot.slane %v538, %v542
        %545 = vmatprep.subr.mxu0 0.0
        %546 = vmatpush1.msra.mxu0 %v522
        %547 = vmatprep.subr.mxu0 0.0
        %548 = vmatpush1.msra.mxu0 %v523
        %549 = vmatprep.subr.mxu0 0.0
        %550 = vmatpush1.msra.mxu0 %v524
        %551 = vmatprep.subr.mxu0 0.0
        %552 = vmatpush1.msra.mxu0 %v525
        %553 = vmatprep.subr.mxu0 0.0
        %554 = vmatpush1.msra.mxu0 %v526
        %555 = vmatprep.subr.mxu0 0.0
        %556 = vmatpush1.msra.mxu0 %v527
        %557 = vmatprep.subr.mxu0 0.0
        %558 = vmatpush1.msra.mxu0 %v528
        %559 = vmatprep.subr.mxu0 0.0
        %560 = vmatpush1.msra.mxu0 %v529
        %561 = vmatprep.subr.mxu0 0.0
        %562 = vmatpush1.msra.mxu0 %v530
        %563 = vmatprep.subr.mxu0 0.0
        %564 = vmatpush1.msra.mxu0 %v531
        %565 = vmatprep.subr.mxu0 0.0
        %566 = vmatpush1.msra.mxu0 %v532
        %567 = vmatprep.subr.mxu0 0.0
        %568 = vmatpush1.msra.mxu0 %v533
        %569 = vmatprep.subr.mxu0 0.0
        %570 = vmatpush1.msra.mxu0 %v534
        %571 = vmatprep.subr.mxu0 0.0
        %572 = vmatpush1.msra.mxu0 %v535
        %573 = vmatprep.subr.mxu0 0.0
        %574 = vmatpush1.msra.mxu0 %v536
        %575 = vmatprep.subr.mxu0 0.0
        %576 = vmatpush1.msra.mxu0 %v537
        %577 = vmatprep.subr.mxu0 0.0
        %578 = vmatpush1.msra.mxu0 0.0
        %579 = vmatprep.subr.mxu0 0.0
        %580 = vmatpush1.msra.mxu0 0.0
        %581 = vmatprep.subr.mxu0 0.0
        %582 = vmatpush1.msra.mxu0 0.0
        %583 = vmatprep.subr.mxu0 0.0
        %584 = vmatpush1.msra.mxu0 0.0
        %585 = vmatprep.subr.mxu0 0.0
        %586 = vmatpush1.msra.mxu0 0.0
        %587 = vmatprep.subr.mxu0 0.0
        %588 = vmatpush1.msra.mxu0 0.0
        %589 = vmatprep.subr.mxu0 0.0
        %590 = vmatpush1.msra.mxu0 0.0
        %591 = vmatprep.subr.mxu0 0.0
        %592 = vmatpush1.msra.mxu0 0.0
        %593 = vmatprep.subr.mxu0 0.0
        %594 = vmatpush1.msra.mxu0 0.0
        %595 = vmatprep.subr.mxu0 0.0
        %596 = vmatpush1.msra.mxu0 0.0
        %597 = vmatprep.subr.mxu0 0.0
        %598 = vmatpush1.msra.mxu0 0.0
        %599 = vmatprep.subr.mxu0 0.0
        %600 = vmatpush1.msra.mxu0 0.0
        %601 = vmatprep.subr.mxu0 0.0
        %602 = vmatpush1.msra.mxu0 0.0
        %603 = vmatprep.subr.mxu0 0.0
        %604 = vmatpush1.msra.mxu0 0.0
        %605 = vmatprep.subr.mxu0 0.0
        %606 = vmatpush1.msra.mxu0 0.0
        %607 = vmatprep.subr.mxu0 0.0
        %608 = vmatpush1.msra.mxu0 0.0
        %609 = vmatprep.mubr.f32.mxu0 0.0
        %610 = vmatmul.mubr.f32.gmra.mrb[0].mxu0 %v521
        %v611 = vpop.f32.mrb[0].mxu0
        %v612 = vadd.f32 %v543, %v611
        %v613 = vpop.f32.mrb[0].mxu0
        %614 = vdwg.mxu0
        %vm615 = vcmp.gt.f32.partialorder %v612, 0.0
        %v616 = vmul.f32 %v612, 0.2
        %v617 = vsel %vm615, %v612, %v616
        %v618 = vld [vmem:[#allocation11] sm:$0xff]
        %v619 = vld [vmem:[#allocation11 + $0x8] sm:$0xff]
        %v620 = vld [vmem:[#allocation11 + $0x10] sm:$0xff]
        %v621 = vld [vmem:[#allocation11 + $0x18] sm:$0xff]
        %v622 = vld [vmem:[#allocation11 + $0x20] sm:$0xff]
        %v623 = vld [vmem:[#allocation11 + $0x28] sm:$0xff]
        %v624 = vld [vmem:[#allocation11 + $0x30] sm:$0xff]
        %v625 = vld [vmem:[#allocation11 + $0x38] sm:$0xff]
        %v626 = vld [vmem:[#allocation11 + $0x40] sm:$0xff]
        %v627 = vld [vmem:[#allocation11 + $0x48] sm:$0xff]
        %v628 = vld [vmem:[#allocation11 + $0x50] sm:$0xff]
        %v629 = vld [vmem:[#allocation11 + $0x58] sm:$0xff]
        %v630 = vld [vmem:[#allocation11 + $0x60] sm:$0xff]
        %v631 = vld [vmem:[#allocation11 + $0x68] sm:$0xff]
        %v632 = vld [vmem:[#allocation11 + $0x70] sm:$0xff]
        %v633 = vld [vmem:[#allocation11 + $0x78] sm:$0xff]
        %v634 = vld [vmem:[%s6] sm:$0x1]
        %v636 = vlaneseq
        %v637 = vshrl.u32 %v636, 7
        %v638 = vsub.s32 0, %v637
        %v639 = vrot.slane %v634, %v638
        %641 = vmatprep.subr.mxu0 0.0
        %642 = vmatpush1.msra.mxu0 %v618
        %643 = vmatprep.subr.mxu0 0.0
        %644 = vmatpush1.msra.mxu0 %v619
        %645 = vmatprep.subr.mxu0 0.0
        %646 = vmatpush1.msra.mxu0 %v620
        %647 = vmatprep.subr.mxu0 0.0
        %648 = vmatpush1.msra.mxu0 %v621
        %649 = vmatprep.subr.mxu0 0.0
        %650 = vmatpush1.msra.mxu0 %v622
        %651 = vmatprep.subr.mxu0 0.0
        %652 = vmatpush1.msra.mxu0 %v623
        %653 = vmatprep.subr.mxu0 0.0
        %654 = vmatpush1.msra.mxu0 %v624
        %655 = vmatprep.subr.mxu0 0.0
        %656 = vmatpush1.msra.mxu0 %v625
        %657 = vmatprep.subr.mxu0 0.0
        %658 = vmatpush1.msra.mxu0 %v626
        %659 = vmatprep.subr.mxu0 0.0
        %660 = vmatpush1.msra.mxu0 %v627
        %661 = vmatprep.subr.mxu0 0.0
        %662 = vmatpush1.msra.mxu0 %v628
        %663 = vmatprep.subr.mxu0 0.0
        %664 = vmatpush1.msra.mxu0 %v629
        %665 = vmatprep.subr.mxu0 0.0
        %666 = vmatpush1.msra.mxu0 %v630
        %667 = vmatprep.subr.mxu0 0.0
        %668 = vmatpush1.msra.mxu0 %v631
        %669 = vmatprep.subr.mxu0 0.0
        %670 = vmatpush1.msra.mxu0 %v632
        %671 = vmatprep.subr.mxu0 0.0
        %672 = vmatpush1.msra.mxu0 %v633
        %673 = vmatprep.subr.mxu0 0.0
        %674 = vmatpush1.msra.mxu0 0.0
        %675 = vmatprep.subr.mxu0 0.0
        %676 = vmatpush1.msra.mxu0 0.0
        %677 = vmatprep.subr.mxu0 0.0
        %678 = vmatpush1.msra.mxu0 0.0
        %679 = vmatprep.subr.mxu0 0.0
        %680 = vmatpush1.msra.mxu0 0.0
        %681 = vmatprep.subr.mxu0 0.0
        %682 = vmatpush1.msra.mxu0 0.0
        %683 = vmatprep.subr.mxu0 0.0
        %684 = vmatpush1.msra.mxu0 0.0
        %685 = vmatprep.subr.mxu0 0.0
        %686 = vmatpush1.msra.mxu0 0.0
        %687 = vmatprep.subr.mxu0 0.0
        %688 = vmatpush1.msra.mxu0 0.0
        %689 = vmatprep.subr.mxu0 0.0
        %690 = vmatpush1.msra.mxu0 0.0
        %691 = vmatprep.subr.mxu0 0.0
        %692 = vmatpush1.msra.mxu0 0.0
        %693 = vmatprep.subr.mxu0 0.0
        %694 = vmatpush1.msra.mxu0 0.0
        %695 = vmatprep.subr.mxu0 0.0
        %696 = vmatpush1.msra.mxu0 0.0
        %697 = vmatprep.subr.mxu0 0.0
        %698 = vmatpush1.msra.mxu0 0.0
        %699 = vmatprep.subr.mxu0 0.0
        %700 = vmatpush1.msra.mxu0 0.0
        %701 = vmatprep.subr.mxu0 0.0
        %702 = vmatpush1.msra.mxu0 0.0
        %703 = vmatprep.subr.mxu0 0.0
        %704 = vmatpush1.msra.mxu0 0.0
        %705 = vmatprep.mubr.f32.mxu0 0.0
        %706 = vmatmul.mubr.f32.gmra.mrb[0].mxu0 %v617
        %v707 = vpop.f32.mrb[0].mxu0
        %v708 = vadd.f32 %v639, %v707
        %v709 = vpop.f32.mrb[0].mxu0
        %710 = vdwg.mxu0
        %vm711 = vcmp.gt.f32.partialorder %v708, 0.0
        %v712 = vmul.f32 %v708, 0.2
        %v713 = vsel %vm711, %v708, %v712
        %v714 = vld [vmem:[#allocation12] sm:$0xff]
        %v715 = vld [vmem:[#allocation12 + $0x8] sm:$0xff]
        %v716 = vld [vmem:[#allocation12 + $0x10] sm:$0xff]
        %v717 = vld [vmem:[#allocation12 + $0x18] sm:$0xff]
        %v718 = vld [vmem:[#allocation12 + $0x20] sm:$0xff]
        %v719 = vld [vmem:[#allocation12 + $0x28] sm:$0xff]
        %v720 = vld [vmem:[#allocation12 + $0x30] sm:$0xff]
        %v721 = vld [vmem:[#allocation12 + $0x38] sm:$0xff]
        %v722 = vld [vmem:[#allocation12 + $0x40] sm:$0xff]
        %v723 = vld [vmem:[#allocation12 + $0x48] sm:$0xff]
        %v724 = vld [vmem:[#allocation12 + $0x50] sm:$0xff]
        %v725 = vld [vmem:[#allocation12 + $0x58] sm:$0xff]
        %v726 = vld [vmem:[#allocation12 + $0x60] sm:$0xff]
        %v727 = vld [vmem:[#allocation12 + $0x68] sm:$0xff]
        %v728 = vld [vmem:[#allocation12 + $0x70] sm:$0xff]
        %v729 = vld [vmem:[#allocation12 + $0x78] sm:$0xff]
        %v730 = vld [vmem:[%s8] sm:$0x1]
        %v732 = vlaneseq
        %v733 = vshrl.u32 %v732, 7
        %v734 = vsub.s32 0, %v733
        %v735 = vrot.slane %v730, %v734
        %737 = vmatprep.subr.mxu0 0.0
        %738 = vmatpush1.msra.mxu0 %v714
        %739 = vmatprep.subr.mxu0 0.0
        %740 = vmatpush1.msra.mxu0 %v715
        %741 = vmatprep.subr.mxu0 0.0
        %742 = vmatpush1.msra.mxu0 %v716
        %743 = vmatprep.subr.mxu0 0.0
        %744 = vmatpush1.msra.mxu0 %v717
        %745 = vmatprep.subr.mxu0 0.0
        %746 = vmatpush1.msra.mxu0 %v718
        %747 = vmatprep.subr.mxu0 0.0
        %748 = vmatpush1.msra.mxu0 %v719
        %749 = vmatprep.subr.mxu0 0.0
        %750 = vmatpush1.msra.mxu0 %v720
        %751 = vmatprep.subr.mxu0 0.0
        %752 = vmatpush1.msra.mxu0 %v721
        %753 = vmatprep.subr.mxu0 0.0
        %754 = vmatpush1.msra.mxu0 %v722
        %755 = vmatprep.subr.mxu0 0.0
        %756 = vmatpush1.msra.mxu0 %v723
        %757 = vmatprep.subr.mxu0 0.0
        %758 = vmatpush1.msra.mxu0 %v724
        %759 = vmatprep.subr.mxu0 0.0
        %760 = vmatpush1.msra.mxu0 %v725
        %761 = vmatprep.subr.mxu0 0.0
        %762 = vmatpush1.msra.mxu0 %v726
        %763 = vmatprep.subr.mxu0 0.0
        %764 = vmatpush1.msra.mxu0 %v727
        %765 = vmatprep.subr.mxu0 0.0
        %766 = vmatpush1.msra.mxu0 %v728
        %767 = vmatprep.subr.mxu0 0.0
        %768 = vmatpush1.msra.mxu0 %v729
        %769 = vmatprep.subr.mxu0 0.0
        %770 = vmatpush1.msra.mxu0 0.0
        %771 = vmatprep.subr.mxu0 0.0
        %772 = vmatpush1.msra.mxu0 0.0
        %773 = vmatprep.subr.mxu0 0.0
        %774 = vmatpush1.msra.mxu0 0.0
        %775 = vmatprep.subr.mxu0 0.0
        %776 = vmatpush1.msra.mxu0 0.0
        %777 = vmatprep.subr.mxu0 0.0
        %778 = vmatpush1.msra.mxu0 0.0
        %779 = vmatprep.subr.mxu0 0.0
        %780 = vmatpush1.msra.mxu0 0.0
        %781 = vmatprep.subr.mxu0 0.0
        %782 = vmatpush1.msra.mxu0 0.0
        %783 = vmatprep.subr.mxu0 0.0
        %784 = vmatpush1.msra.mxu0 0.0
        %785 = vmatprep.subr.mxu0 0.0
        %786 = vmatpush1.msra.mxu0 0.0
        %787 = vmatprep.subr.mxu0 0.0
        %788 = vmatpush1.msra.mxu0 0.0
        %789 = vmatprep.subr.mxu0 0.0
        %790 = vmatpush1.msra.mxu0 0.0
        %791 = vmatprep.subr.mxu0 0.0
        %792 = vmatpush1.msra.mxu0 0.0
        %793 = vmatprep.subr.mxu0 0.0
        %794 = vmatpush1.msra.mxu0 0.0
        %795 = vmatprep.subr.mxu0 0.0
        %796 = vmatpush1.msra.mxu0 0.0
        %797 = vmatprep.subr.mxu0 0.0
        %798 = vmatpush1.msra.mxu0 0.0
        %799 = vmatprep.subr.mxu0 0.0
        %800 = vmatpush1.msra.mxu0 0.0
        %801 = vmatprep.mubr.f32.mxu0 0.0
        %802 = vmatmul.mubr.f32.gmra.mrb[0].mxu0 %v713
        %v803 = vpop.f32.mrb[0].mxu0
        %v804 = vadd.f32 %v735, %v803
        %v805 = vpop.f32.mrb[0].mxu0
        %806 = vdwg.mxu0
        %v807 = vlaneseq
        %v808 = vand.u32 %v807, 127
        %vm809 = vcmp.lt.s32.totalorder %v808, 8
        %v810 = vsel %vm809, %v804, -1e+30
        %811 = vmax.xlane.f32.xlu0 %v810
        %v812 = vpop.xlane.xlu0 %811
        %v813 = vsub.f32 %v810, %v812
        %v814 = vmul.f32 %v813, 1.442695
        %v815 = vpow.pop %v814
        %816 = vadd.xlane.f32.xlu0 %v815
        %v817 = vpop.xlane.xlu0 %816
        %v818 = vrcp.pop %v817
        %v819 = vmul.f32 %v815, %v818
        %820 = vst [vmem:[%s417] sm:$0xff] %v819
        %s821 = sand.u32 %s243, 1
        %s822 = scalar_lea.sflag [#allocation5], %s821
        %s823 = sand.u32 %s243, 1
        %s824 = smul.addr %s823, 8
        %s825 = scalar_lea.vmem [#allocation14], %s824
        // Predicated region
        $region85: #{tpu_custom_call.1} parent=55 // pred_check
          %p826 = pneg %p253
        $region86: #{tpu_custom_call.1} parent=55 // pred_check_branch
          %828 = sbr.rel (%p826) target = $region88
        $region87: #{tpu_custom_call.1} parent=55 // pred_region
          %s830 = ssub.s32 128, 128
          %831 = vsyncadd %s822, %s830
          %s832 = smul.addr %s31, 4
          %s833 = sadd.s32 %s32, %s832
          %s834 = smul.addr %s833, 128
          %s835 = scalar_lea.hbm %s9, %s834
          %s837 = sshll.u32 %s825, 4
          %s838 = int_to_ptr.vmem [resolvable:$true] %s837
          %840 = dma.vmem_to_hbm [thread:$0]  %s838, 128, %s835, %s822
        $region88: #{tpu_custom_call.1} parent=55 // pred_fallthru
          _
      $region56: #{tpu_custom_call.1} parent=5 // pred_fallthru
        _
      %p841 = scmp.le.s32.totalorder 2, %s22
      // Predicated region
      $region89: #{tpu_custom_call.1} parent=5 // pred_check
        %p842 = pneg %p841
      $region90: #{tpu_custom_call.1} parent=5 // pred_check_branch
        %844 = sbr.rel (%p842) target = $region92
      $region91: #{tpu_custom_call.1} parent=5 // pred_region
        %s845 = ssub.s32 %s22, 2
        // Predicated region
        $region93: #{tpu_custom_call.1} parent=91 // pred_check
          %p846 = pneg %p259
        $region94: #{tpu_custom_call.1} parent=91 // pred_check_branch
          %848 = sbr.rel (%p846) target = $region96
        $region95: #{tpu_custom_call.1} parent=91 // pred_region
          %s849 = sand.u32 %s244, 1
          %s850 = scalar_lea.sflag [#allocation5], %s849
          %s851 = sand.u32 %s244, 1
          %s852 = smul.addr %s851, 8
          %s853 = scalar_lea.vmem [#allocation14], %s852
          %854 = dma.done %s850, 128
        $region96: #{tpu_custom_call.1} parent=91 // pred_fallthru
          _
      $region92: #{tpu_custom_call.1} parent=5 // pred_fallthru
        _
    $region6: #{tpu_custom_call.1} parent=1 // loop_footer
      %s26 = sadd.s32 1, %s22
    $region7: #{tpu_custom_call.1} parent=1 // loop_footer_branch
      %21 = sbr.rel target = $region3
    $region8: #{tpu_custom_call.1} parent=1 // loop_exit
      _
    %855 = vsyncpa [#allocation4], 1
    %s856 = scalar_lea.sflag [#allocation4], 1
    %857 = vsyncpa %s856, 1
    %858 = vsyncpa [#allocation7], 1
    %859 = vsyncpa [#allocation10], 1
    %860 = vsyncpa [#allocation13], 1
    %861 = vsyncpa [#allocation5], 1
    %s862 = scalar_lea.sflag [#allocation5], 1
    %863 = vsyncpa %s862, 1

// kernel: tpu_custom_call.1
$region0: #{tpu_custom_call.1}
  #allocation0 [shape = 'u32[]', space=smem, size = 0x4, offset = 0x4, fixed_abs, tag = 'smem constant byte address 0x4 - core index']
  #allocation1 [shape = 'u32[144,128]{1,0:T(1,128)}', space=vmem, size = 0x12000, scoped, tag = 'internal scratch']
  #allocation2 [shape = 'f32[8,128]{1,0:T(8,128)}', space=vmem, size = 0x1000, scoped, tag = 'scratch operand']
  %s0 = inlined_call_operand.hbm [shape: f32[8,128], index: 0, kind: input, shape index: {}]
  %s1 = inlined_call_operand.hbm [shape: f32[32,128], index: 1, kind: input, shape index: {}]
  %s2 = inlined_call_operand.hbm [shape: f32[128,128], index: 2, kind: input, shape index: {}]
  %s3 = inlined_call_operand.hbm [shape: f32[128,128], index: 3, kind: input, shape index: {}]
  %s4 = inlined_call_operand.vmem [shape: f32[1,128], index: 4, kind: input, shape index: {}]
  %s5 = inlined_call_operand.hbm [shape: f32[128,128], index: 5, kind: input, shape index: {}]
  %s6 = inlined_call_operand.vmem [shape: f32[1,128], index: 6, kind: input, shape index: {}]
  %s7 = inlined_call_operand.hbm [shape: f32[128,128], index: 7, kind: input, shape index: {}]
  %s8 = inlined_call_operand.vmem [shape: f32[1,128], index: 8, kind: input, shape index: {}]
  %s9 = inlined_call_operand.hbm [shape: f32[8,512], index: 9, kind: output, shape index: {}]
  %s10 = sld [smem:[#allocation0]]
  $region97: #{tpu_custom_call.1} parent=0
    _
  %s12 = ssub.s32 1, %s10
  %s13 = scalar_select 0, %s12, %s10
  $region1: #{tpu_custom_call.1} parent=0
    #allocation3 [shape = 'u8[4096]{0}', space=vmem, size = 0x1000, scoped, tag = 'input window, operand 0, single buffered']
    #allocation4 [shape = 's32[2]{0}', space=sflag, size = 0x8, scoped, tag = 'scoped memory for tpu_custom_call.1']
    #allocation5 [shape = 's32[2]{0}', space=sflag, size = 0x8, scoped, tag = 'scoped memory for tpu_custom_call.1']
    #allocation6 [shape = 'u8[16384]{0}', space=vmem, size = 0x4000, scoped, tag = 'input window, operand 1, single buffered']
    #allocation7 [shape = 's32[1]{0}', space=sflag, size = 0x4, scoped, tag = 'scoped memory for tpu_custom_call.1']
    #allocation8 [shape = 'u8[65536]{0}', space=vmem, size = 0x10000, scoped, tag = 'input window, operand 2, single buffered']
    #allocation9 [shape = 'u8[65536]{0}', space=vmem, size = 0x10000, scoped, tag = 'input window, operand 3, single buffered']
    #allocation10 [shape = 's32[1]{0}', space=sflag, size = 0x4, scoped, tag = 'scoped memory for tpu_custom_call.1']
    #allocation11 [shape = 'u8[65536]{0}', space=vmem, size = 0x10000, scoped, tag = 'input window, operand 5, single buffered']
    #allocation12 [shape = 'u8[65536]{0}', space=vmem, size = 0x10000, scoped, tag = 'input window, operand 7, single buffered']
    #allocation13 [shape = 's32[1]{0}', space=sflag, size = 0x4, scoped, tag = 'scoped memory for tpu_custom_call.1']
    #allocation14 [shape = 'u8[8192]{0}', space=vmem, size = 0x2000, scoped, tag = 'output window, operand 0']
    %14 = vsyncpa [#allocation4], 0
    %15 = vsyncpa [#allocation7], 0
    %16 = vsyncpa [#allocation10], 0
    %17 = vsyncpa [#allocation13], 0
    %18 = vsyncpa [#allocation5], 0
    %s19 = scalar_lea.sflag [#allocation5], 1
    %20 = vsyncpa %s19, 0
    loop: start=0, step=1, limit=6
    $region2: #{tpu_custom_call.1} parent=1 // loop_pre_header
      _
    $region3: #{tpu_custom_call.1} parent=1 // loop_header
      %s22 = sphi 0, %s26
      %p23 = scmp.ge.s32.totalorder %s22, 6
      %s29 = sphi 0, %s41
      %s30 = sphi 0, %s37
      %s31 = sphi 0, %s29
      %s32 = sphi 0, %s30
      %s33 = sphi 0, %s31
      %s34 = sphi 0, %s32
      %s44 = sphi 0, %s46
      %s47 = sphi 0, %s44
      %s48 = sphi 0, %s47
      %s64 = sphi 0, %s48
      %s68 = sphi 0, %s68
      %s70 = sphi 0, %s68
      %s71 = sphi 0, %s70
      %s85 = sphi 0, %s71
      %s89 = sphi 0, %s89
      %s91 = sphi 0, %s89
      %s92 = sphi 0, %s91
      %s106 = sphi 0, %s92
      %s110 = sphi 0, %s110
      %s112 = sphi 0, %s110
      %s113 = sphi 0, %s112
      %s127 = sphi 0, %s113
      %s131 = sphi 0, %s131
      %s133 = sphi 0, %s131
      %s134 = sphi 0, %s133
      %s148 = sphi 0, %s134
      %s152 = sphi 0, %s152
      %s154 = sphi 0, %s152
      %s155 = sphi 0, %s154
      %s169 = sphi 0, %s155
      %s173 = sphi 0, %s173
      %s175 = sphi 0, %s173
      %s176 = sphi 0, %s175
      %s190 = sphi 0, %s176
      %s194 = sphi 0, %s194
      %s196 = sphi 0, %s194
      %s197 = sphi 0, %s196
      %s211 = sphi 0, %s197
      %s215 = sphi 0, %s215
      %s217 = sphi 0, %s215
      %s218 = sphi 0, %s217
      %s232 = sphi 0, %s218
      %s240 = sphi 0, %s242
      %s243 = sphi 0, %s240
      %s244 = sphi 0, %s243
      %s260 = sphi 0, %s244
    $region4: #{tpu_custom_call.1} parent=1 // loop_header_branch
      %25 = sbr.rel (%p23) target = $region8
    $region5: #{tpu_custom_call.1} parent=1 // loop_body
      %s27 = ssub.s32 %s22, 1
      %s28 = ssub.s32 %s22, 2
      %s35 = sadd.s32 1, %s30
      %p36 = scmp.ge.s32.totalorder %s35, 4
      %s37 = scalar_select %p36, 0, %s35
      %s38 = sadd.s32 1, %s29
      %s39 = scalar_select %p36, %s38, %s29
      %p40 = scmp.ge.s32.totalorder %s39, 1
      %s41 = scalar_select %p40, 0, %s39
      %s42 = ssub.s32 %s29, %s41
      %p43 = scmp.eq.s32.totalorder %s42, 0
      %s45 = sadd.s32 %s44, 1
      %s46 = scalar_select %p43, %s44, %s45
      %p49 = pneg %p43
      %p50 = scmp.eq.s32.totalorder %s22, 3
      %p51 = por %p49, %p50
      %p52 = scmp.ne.s32.totalorder %s44, %s47
      %p53 = scmp.eq.s32.totalorder %s22, 0
      %p54 = por %p52, %p53
      %p55 = scmp.ne.s32.totalorder %s44, %s47
      %p56 = scmp.eq.s32.totalorder %s27, 3
      %p57 = por %p55, %p56
      %p58 = scmp.ne.s32.totalorder %s47, %s48
      %p59 = scmp.eq.s32.totalorder %s27, 0
      %p60 = por %p58, %p59
      %p61 = scmp.ne.s32.totalorder %s47, %s48
      %p62 = scmp.eq.s32.totalorder %s28, 3
      %p63 = por %p61, %p62
      %p65 = scmp.ne.s32.totalorder %s48, %s64
      %p66 = scmp.eq.s32.totalorder %s28, 0
      %p67 = por %p65, %p66
      %s69 = sadd.s32 %s68, 1
      %p72 = scmp.eq.s32.totalorder %s22, 3
      %p73 = scmp.ne.s32.totalorder %s68, %s70
      %p74 = scmp.eq.s32.totalorder %s22, 0
      %p75 = por %p73, %p74
      %p76 = scmp.ne.s32.totalorder %s68, %s70
      %p77 = scmp.eq.s32.totalorder %s27, 3
      %p78 = por %p76, %p77
      %p79 = scmp.ne.s32.totalorder %s70, %s71
      %p80 = scmp.eq.s32.totalorder %s27, 0
      %p81 = por %p79, %p80
      %p82 = scmp.ne.s32.totalorder %s70, %s71
      %p83 = scmp.eq.s32.totalorder %s28, 3
      %p84 = por %p82, %p83
      %p86 = scmp.ne.s32.totalorder %s71, %s85
      %p87 = scmp.eq.s32.totalorder %s28, 0
      %p88 = por %p86, %p87
      %s90 = sadd.s32 %s89, 1
      %p93 = scmp.eq.s32.totalorder %s22, 3
      %p94 = scmp.ne.s32.totalorder %s89, %s91
      %p95 = scmp.eq.s32.totalorder %s22, 0
      %p96 = por %p94, %p95
      %p97 = scmp.ne.s32.totalorder %s89, %s91
      %p98 = scmp.eq.s32.totalorder %s27, 3
      %p99 = por %p97, %p98
      %p100 = scmp.ne.s32.totalorder %s91, %s92
      %p101 = scmp.eq.s32.totalorder %s27, 0
      %p102 = por %p100, %p101
      %p103 = scmp.ne.s32.totalorder %s91, %s92
      %p104 = scmp.eq.s32.totalorder %s28, 3
      %p105 = por %p103, %p104
      %p107 = scmp.ne.s32.totalorder %s92, %s106
      %p108 = scmp.eq.s32.totalorder %s28, 0
      %p109 = por %p107, %p108
      %s111 = sadd.s32 %s110, 1
      %p114 = scmp.eq.s32.totalorder %s22, 3
      %p115 = scmp.ne.s32.totalorder %s110, %s112
      %p116 = scmp.eq.s32.totalorder %s22, 0
      %p117 = por %p115, %p116
      %p118 = scmp.ne.s32.totalorder %s110, %s112
      %p119 = scmp.eq.s32.totalorder %s27, 3
      %p120 = por %p118, %p119
      %p121 = scmp.ne.s32.totalorder %s112, %s113
      %p122 = scmp.eq.s32.totalorder %s27, 0
      %p123 = por %p121, %p122
      %p124 = scmp.ne.s32.totalorder %s112, %s113
      %p125 = scmp.eq.s32.totalorder %s28, 3
      %p126 = por %p124, %p125
      %p128 = scmp.ne.s32.totalorder %s113, %s127
      %p129 = scmp.eq.s32.totalorder %s28, 0
      %p130 = por %p128, %p129
      %s132 = sadd.s32 %s131, 1
      %p135 = scmp.eq.s32.totalorder %s22, 3
      %p136 = scmp.ne.s32.totalorder %s131, %s133
      %p137 = scmp.eq.s32.totalorder %s22, 0
      %p138 = por %p136, %p137
      %p139 = scmp.ne.s32.totalorder %s131, %s133
      %p140 = scmp.eq.s32.totalorder %s27, 3
      %p141 = por %p139, %p140
      %p142 = scmp.ne.s32.totalorder %s133, %s134
      %p143 = scmp.eq.s32.totalorder %s27, 0
      %p144 = por %p142, %p143
      %p145 = scmp.ne.s32.totalorder %s133, %s134
      %p146 = scmp.eq.s32.totalorder %s28, 3
      %p147 = por %p145, %p146
      %p149 = scmp.ne.s32.totalorder %s134, %s148
      %p150 = scmp.eq.s32.totalorder %s28, 0
      %p151 = por %p149, %p150
      %s153 = sadd.s32 %s152, 1
      %p156 = scmp.eq.s32.totalorder %s22, 3
      %p157 = scmp.ne.s32.totalorder %s152, %s154
      %p158 = scmp.eq.s32.totalorder %s22, 0
      %p159 = por %p157, %p158
      %p160 = scmp.ne.s32.totalorder %s152, %s154
      %p161 = scmp.eq.s32.totalorder %s27, 3
      %p162 = por %p160, %p161
      %p163 = scmp.ne.s32.totalorder %s154, %s155
      %p164 = scmp.eq.s32.totalorder %s27, 0
      %p165 = por %p163, %p164
      %p166 = scmp.ne.s32.totalorder %s154, %s155
      %p167 = scmp.eq.s32.totalorder %s28, 3
      %p168 = por %p166, %p167
      %p170 = scmp.ne.s32.totalorder %s155, %s169
      %p171 = scmp.eq.s32.totalorder %s28, 0
      %p172 = por %p170, %p171
      %s174 = sadd.s32 %s173, 1
      %p177 = scmp.eq.s32.totalorder %s22, 3
      %p178 = scmp.ne.s32.totalorder %s173, %s175
      %p179 = scmp.eq.s32.totalorder %s22, 0
      %p180 = por %p178, %p179
      %p181 = scmp.ne.s32.totalorder %s173, %s175
      %p182 = scmp.eq.s32.totalorder %s27, 3
      %p183 = por %p181, %p182
      %p184 = scmp.ne.s32.totalorder %s175, %s176
      %p185 = scmp.eq.s32.totalorder %s27, 0
      %p186 = por %p184, %p185
      %p187 = scmp.ne.s32.totalorder %s175, %s176
      %p188 = scmp.eq.s32.totalorder %s28, 3
      %p189 = por %p187, %p188
      %p191 = scmp.ne.s32.totalorder %s176, %s190
      %p192 = scmp.eq.s32.totalorder %s28, 0
      %p193 = por %p191, %p192
      %s195 = sadd.s32 %s194, 1
      %p198 = scmp.eq.s32.totalorder %s22, 3
      %p199 = scmp.ne.s32.totalorder %s194, %s196
      %p200 = scmp.eq.s32.totalorder %s22, 0
      %p201 = por %p199, %p200
      %p202 = scmp.ne.s32.totalorder %s194, %s196
      %p203 = scmp.eq.s32.totalorder %s27, 3
      %p204 = por %p202, %p203
      %p205 = scmp.ne.s32.totalorder %s196, %s197
      %p206 = scmp.eq.s32.totalorder %s27, 0
      %p207 = por %p205, %p206
      %p208 = scmp.ne.s32.totalorder %s196, %s197
      %p209 = scmp.eq.s32.totalorder %s28, 3
      %p210 = por %p208, %p209
      %p212 = scmp.ne.s32.totalorder %s197, %s211
      %p213 = scmp.eq.s32.totalorder %s28, 0
      %p214 = por %p212, %p213
      %s216 = sadd.s32 %s215, 1
      %p219 = scmp.eq.s32.totalorder %s22, 3
      %p220 = scmp.ne.s32.totalorder %s215, %s217
      %p221 = scmp.eq.s32.totalorder %s22, 0
      %p222 = por %p220, %p221
      %p223 = scmp.ne.s32.totalorder %s215, %s217
      %p224 = scmp.eq.s32.totalorder %s27, 3
      %p225 = por %p223, %p224
      %p226 = scmp.ne.s32.totalorder %s217, %s218
      %p227 = scmp.eq.s32.totalorder %s27, 0
      %p228 = por %p226, %p227
      %p229 = scmp.ne.s32.totalorder %s217, %s218
      %p230 = scmp.eq.s32.totalorder %s28, 3
      %p231 = por %p229, %p230
      %p233 = scmp.ne.s32.totalorder %s218, %s232
      %p234 = scmp.eq.s32.totalorder %s28, 0
      %p235 = por %p233, %p234
      %s236 = ssub.s32 %s29, %s41
      %s237 = ssub.s32 %s30, %s37
      %s238 = sor.u32 %s236, %s237
      %p239 = scmp.eq.s32.totalorder %s238, 0
      %s241 = sadd.s32 %s240, 1
      %s242 = scalar_select %p239, %s240, %s241
      %p245 = pneg %p239
      %p246 = scmp.eq.s32.totalorder %s22, 3
      %p247 = por %p245, %p246
      %p248 = scmp.ne.s32.totalorder %s240, %s243
      %p249 = scmp.eq.s32.totalorder %s22, 0
      %p250 = por %p248, %p249
      %p251 = scmp.ne.s32.totalorder %s240, %s243
      %p252 = scmp.eq.s32.totalorder %s27, 3
      %p253 = por %p251, %p252
      %p254 = scmp.ne.s32.totalorder %s243, %s244
      %p255 = scmp.eq.s32.totalorder %s27, 0
      %p256 = por %p254, %p255
      %p257 = scmp.ne.s32.totalorder %s243, %s244
      %p258 = scmp.eq.s32.totalorder %s28, 3
      %p259 = por %p257, %p258
      %p261 = scmp.ne.s32.totalorder %s244, %s260
      %p262 = scmp.eq.s32.totalorder %s28, 0
      %p263 = por %p261, %p262
      %p264 = scmp.le.s32.totalorder 1, %s22
      %p265 = scmp.lt.s32.totalorder %s22, 5
      %p266 = pnand %p264, %p265
      %p267 = pneg %p266
      // Predicated region
      $region9: #{tpu_custom_call.1} parent=5 // pred_check
        _
      $region10: #{tpu_custom_call.1} parent=5 // pred_check_branch
        %269 = sbr.rel (%p266) target = $region12
      $region11: #{tpu_custom_call.1} parent=5 // pred_region
        %s270 = ssub.s32 %s22, 1
        // Predicated region
        $region13: #{tpu_custom_call.1} parent=11 // pred_check
          %p271 = pneg %p60
        $region14: #{tpu_custom_call.1} parent=11 // pred_check_branch
          %273 = sbr.rel (%p271) target = $region16
        $region15: #{tpu_custom_call.1} parent=11 // pred_region
          %s275 = ssub.s32 128, 128
          %276 = vsyncadd [#allocation4], %s275
          %s277 = smul.addr %s31, 128
          %s278 = scalar_lea.hbm %s0, %s277
          %s280 = sshll.u32 [#allocation3], 4
          %s281 = int_to_ptr.vmem [resolvable:$true] %s280
          %283 = dma.hbm_to_vmem [thread:$0]  %s278, 128, %s281, [#allocation4]
        $region16: #{tpu_custom_call.1} parent=11 // pred_fallthru
          _
        // Predicated region
        $region17: #{tpu_custom_call.1} parent=11 // pred_check
          %p284 = pneg %p81
        $region18: #{tpu_custom_call.1} parent=11 // pred_check_branch
          %286 = sbr.rel (%p284) target = $region20
        $region19: #{tpu_custom_call.1} parent=11 // pred_region
          %s288 = ssub.s32 512, 512
          %289 = vsyncadd [#allocation7], %s288
          %s290 = sshll.u32 [#allocation6], 4
          %s291 = int_to_ptr.vmem [resolvable:$true] %s290
          %296 = dma.hbm_to_vmem [thread:$0]  %s1, 512, %s291, [#allocation7], 128, 128, 8
        $region20: #{tpu_custom_call.1} parent=11 // pred_fallthru
          _
        // Predicated region
        $region21: #{tpu_custom_call.1} parent=11 // pred_check
          %p297 = pneg %p102
        $region22: #{tpu_custom_call.1} parent=11 // pred_check_branch
          %299 = sbr.rel (%p297) target = $region24
        $region23: #{tpu_custom_call.1} parent=11 // pred_region
          %s301 = ssub.s32 2048, 2048
          %302 = vsyncadd [#allocation7], %s301
          %s303 = sshll.u32 [#allocation8], 4
          %s304 = int_to_ptr.vmem [resolvable:$true] %s303
          %309 = dma.hbm_to_vmem [thread:$0]  %s2, 2048, %s304, [#allocation7], 128, 128, 8
        $region24: #{tpu_custom_call.1} parent=11 // pred_fallthru
          _
        // Predicated region
        $region25: #{tpu_custom_call.1} parent=11 // pred_check
          %p310 = pneg %p123
        $region26: #{tpu_custom_call.1} parent=11 // pred_check_branch
          %312 = sbr.rel (%p310) target = $region28
        $region27: #{tpu_custom_call.1} parent=11 // pred_region
          %s314 = ssub.s32 2048, 2048
          %315 = vsyncadd [#allocation10], %s314
          %s316 = sshll.u32 [#allocation9], 4
          %s317 = int_to_ptr.vmem [resolvable:$true] %s316
          %322 = dma.hbm_to_vmem [thread:$0]  %s3, 2048, %s317, [#allocation10], 128, 128, 8
        $region28: #{tpu_custom_call.1} parent=11 // pred_fallthru
          _
        // Predicated region
        $region29: #{tpu_custom_call.1} parent=11 // pred_check
          %p323 = pneg %p144
        $region30: #{tpu_custom_call.1} parent=11 // pred_check_branch
          %325 = sbr.rel (%p323) target = $region32
        $region31: #{tpu_custom_call.1} parent=11 // pred_region
          _
        $region32: #{tpu_custom_call.1} parent=11 // pred_fallthru
          _
        // Predicated region
        $region33: #{tpu_custom_call.1} parent=11 // pred_check
          %p326 = pneg %p165
        $region34: #{tpu_custom_call.1} parent=11 // pred_check_branch
          %328 = sbr.rel (%p326) target = $region36
        $region35: #{tpu_custom_call.1} parent=11 // pred_region
          %s330 = ssub.s32 2048, 2048
          %331 = vsyncadd [#allocation10], %s330
          %s332 = sshll.u32 [#allocation11], 4
          %s333 = int_to_ptr.vmem [resolvable:$true] %s332
          %338 = dma.hbm_to_vmem [thread:$0]  %s5, 2048, %s333, [#allocation10], 128, 128, 8
        $region36: #{tpu_custom_call.1} parent=11 // pred_fallthru
          _
        // Predicated region
        $region37: #{tpu_custom_call.1} parent=11 // pred_check
          %p339 = pneg %p186
        $region38: #{tpu_custom_call.1} parent=11 // pred_check_branch
          %341 = sbr.rel (%p339) target = $region40
        $region39: #{tpu_custom_call.1} parent=11 // pred_region
          _
        $region40: #{tpu_custom_call.1} parent=11 // pred_fallthru
          _
        // Predicated region
        $region41: #{tpu_custom_call.1} parent=11 // pred_check
          %p342 = pneg %p207
        $region42: #{tpu_custom_call.1} parent=11 // pred_check_branch
          %344 = sbr.rel (%p342) target = $region44
        $region43: #{tpu_custom_call.1} parent=11 // pred_region
          %s346 = ssub.s32 2048, 2048
          %347 = vsyncadd [#allocation13], %s346
          %s348 = sshll.u32 [#allocation12], 4
          %s349 = int_to_ptr.vmem [resolvable:$true] %s348
          %354 = dma.hbm_to_vmem [thread:$0]  %s7, 2048, %s349, [#allocation13], 128, 128, 8
        $region44: #{tpu_custom_call.1} parent=11 // pred_fallthru
          _
        // Predicated region
        $region45: #{tpu_custom_call.1} parent=11 // pred_check
          %p355 = pneg %p228
        $region46: #{tpu_custom_call.1} parent=11 // pred_check_branch
          %357 = sbr.rel (%p355) target = $region48
        $region47: #{tpu_custom_call.1} parent=11 // pred_region
          _
        $region48: #{tpu_custom_call.1} parent=11 // pred_fallthru
          _
      $region12: #{tpu_custom_call.1} parent=5 // pred_fallthru
        _
      %p358 = scmp.lt.s32.totalorder %s22, 4
      // Predicated region
      $region49: #{tpu_custom_call.1} parent=5 // pred_check
        %p359 = pneg %p358
      $region50: #{tpu_custom_call.1} parent=5 // pred_check_branch
        %361 = sbr.rel (%p359) target = $region52
      $region51: #{tpu_custom_call.1} parent=5 // pred_region
        _
      $region52: #{tpu_custom_call.1} parent=5 // pred_fallthru
        _
      %p362 = scmp.le.s32.totalorder 1, %s22
      %p363 = scmp.lt.s32.totalorder %s22, 5
      %p364 = pnand %p362, %p363
      %p365 = pneg %p364
      // Predicated region
      $region53: #{tpu_custom_call.1} parent=5 // pred_check
        _
      $region54: #{tpu_custom_call.1} parent=5 // pred_check_branch
        %367 = sbr.rel (%p364) target = $region56
      $region55: #{tpu_custom_call.1} parent=5 // pred_region
        %s368 = ssub.s32 %s22, 1
        // Predicated region
        $region57: #{tpu_custom_call.1} parent=55 // pred_check
          %p369 = pneg %p60
        $region58: #{tpu_custom_call.1} parent=55 // pred_check_branch
          %371 = sbr.rel (%p369) target = $region60
        $region59: #{tpu_custom_call.1} parent=55 // pred_region
          %372 = dma.done [#allocation4], 128
        $region60: #{tpu_custom_call.1} parent=55 // pred_fallthru
          _
        // Predicated region
        $region61: #{tpu_custom_call.1} parent=55 // pred_check
          %p373 = pneg %p81
        $region62: #{tpu_custom_call.1} parent=55 // pred_check_branch
          %375 = sbr.rel (%p373) target = $region64
        $region63: #{tpu_custom_call.1} parent=55 // pred_region
          %376 = dma.done [#allocation7], 512
        $region64: #{tpu_custom_call.1} parent=55 // pred_fallthru
          _
        // Predicated region
        $region65: #{tpu_custom_call.1} parent=55 // pred_check
          %p377 = pneg %p102
        $region66: #{tpu_custom_call.1} parent=55 // pred_check_branch
          %379 = sbr.rel (%p377) target = $region68
        $region67: #{tpu_custom_call.1} parent=55 // pred_region
          %380 = dma.done [#allocation7], 2048
        $region68: #{tpu_custom_call.1} parent=55 // pred_fallthru
          _
        // Predicated region
        $region69: #{tpu_custom_call.1} parent=55 // pred_check
          %p381 = pneg %p123
        $region70: #{tpu_custom_call.1} parent=55 // pred_check_branch
          %383 = sbr.rel (%p381) target = $region72
        $region71: #{tpu_custom_call.1} parent=55 // pred_region
          %384 = dma.done [#allocation10], 2048
        $region72: #{tpu_custom_call.1} parent=55 // pred_fallthru
          _
        // Predicated region
        $region73: #{tpu_custom_call.1} parent=55 // pred_check
          %p385 = pneg %p165
        $region74: #{tpu_custom_call.1} parent=55 // pred_check_branch
          %387 = sbr.rel (%p385) target = $region76
        $region75: #{tpu_custom_call.1} parent=55 // pred_region
          %388 = dma.done [#allocation10], 2048
        $region76: #{tpu_custom_call.1} parent=55 // pred_fallthru
          _
        // Predicated region
        $region77: #{tpu_custom_call.1} parent=55 // pred_check
          %p389 = pneg %p207
        $region78: #{tpu_custom_call.1} parent=55 // pred_check_branch
          %391 = sbr.rel (%p389) target = $region80
        $region79: #{tpu_custom_call.1} parent=55 // pred_region
          %392 = dma.done [#allocation13], 2048
        $region80: #{tpu_custom_call.1} parent=55 // pred_fallthru
          _
        %p393 = pneg %p60
        %p394 = pneg %p57
        %p395 = pneg %p81
        %p396 = pneg %p78
        %p397 = pneg %p102
        %p398 = pneg %p99
        %p399 = pneg %p123
        %p400 = pneg %p120
        %p401 = pneg %p144
        %p402 = pneg %p141
        %p403 = pneg %p165
        %p404 = pneg %p162
        %p405 = pneg %p186
        %p406 = pneg %p183
        %p407 = pneg %p207
        %p408 = pneg %p204
        %p409 = pneg %p228
        %p410 = pneg %p225
        %p411 = pneg %p256
        %p412 = pneg %p253
        %s413 = sand.u32 %s243, 1
        %s414 = scalar_lea.sflag [#allocation5], %s413
        %s415 = sand.u32 %s243, 1
        %s416 = smul.addr %s415, 8
        %s417 = scalar_lea.vmem [#allocation14], %s416
        %p418 = scmp.eq.s32.totalorder %s32, 0
        // Predicated region
        $region81: #{tpu_custom_call.1} parent=55 // pred_check
          %p419 = pneg %p418
        $region82: #{tpu_custom_call.1} parent=55 // pred_check_branch
          %421 = sbr.rel (%p419) target = $region84
        $region83: #{tpu_custom_call.1} parent=55 // pred_region
          %v422 = vld [vmem:[#allocation3] sm:$0xff]
          %v423 = vld [vmem:[#allocation8] sm:$0xff]
          %v424 = vld [vmem:[#allocation8 + $0x8] sm:$0xff]
          %v425 = vld [vmem:[#allocation8 + $0x10] sm:$0xff]
          %v426 = vld [vmem:[#allocation8 + $0x18] sm:$0xff]
          %v427 = vld [vmem:[#allocation8 + $0x20] sm:$0xff]
          %v428 = vld [vmem:[#allocation8 + $0x28] sm:$0xff]
          %v429 = vld [vmem:[#allocation8 + $0x30] sm:$0xff]
          %v430 = vld [vmem:[#allocation8 + $0x38] sm:$0xff]
          %v431 = vld [vmem:[#allocation8 + $0x40] sm:$0xff]
          %v432 = vld [vmem:[#allocation8 + $0x48] sm:$0xff]
          %v433 = vld [vmem:[#allocation8 + $0x50] sm:$0xff]
          %v434 = vld [vmem:[#allocation8 + $0x58] sm:$0xff]
          %v435 = vld [vmem:[#allocation8 + $0x60] sm:$0xff]
          %v436 = vld [vmem:[#allocation8 + $0x68] sm:$0xff]
          %v437 = vld [vmem:[#allocation8 + $0x70] sm:$0xff]
          %v438 = vld [vmem:[#allocation8 + $0x78] sm:$0xff]
          %439 = vmatprep.subr.mxu0 0.0
          %440 = vmatpush1.msra.mxu0 %v423
          %441 = vmatprep.subr.mxu0 0.0
          %442 = vmatpush1.msra.mxu0 %v424
          %443 = vmatprep.subr.mxu0 0.0
          %444 = vmatpush1.msra.mxu0 %v425
          %445 = vmatprep.subr.mxu0 0.0
          %446 = vmatpush1.msra.mxu0 %v426
          %447 = vmatprep.subr.mxu0 0.0
          %448 = vmatpush1.msra.mxu0 %v427
          %449 = vmatprep.subr.mxu0 0.0
          %450 = vmatpush1.msra.mxu0 %v428
          %451 = vmatprep.subr.mxu0 0.0
          %452 = vmatpush1.msra.mxu0 %v429
          %453 = vmatprep.subr.mxu0 0.0
          %454 = vmatpush1.msra.mxu0 %v430
          %455 = vmatprep.subr.mxu0 0.0
          %456 = vmatpush1.msra.mxu0 %v431
          %457 = vmatprep.subr.mxu0 0.0
          %458 = vmatpush1.msra.mxu0 %v432
          %459 = vmatprep.subr.mxu0 0.0
          %460 = vmatpush1.msra.mxu0 %v433
          %461 = vmatprep.subr.mxu0 0.0
          %462 = vmatpush1.msra.mxu0 %v434
          %463 = vmatprep.subr.mxu0 0.0
          %464 = vmatpush1.msra.mxu0 %v435
          %465 = vmatprep.subr.mxu0 0.0
          %466 = vmatpush1.msra.mxu0 %v436
          %467 = vmatprep.subr.mxu0 0.0
          %468 = vmatpush1.msra.mxu0 %v437
          %469 = vmatprep.subr.mxu0 0.0
          %470 = vmatpush1.msra.mxu0 %v438
          %471 = vmatprep.subr.mxu0 0.0
          %472 = vmatpush1.msra.mxu0 0.0
          %473 = vmatprep.subr.mxu0 0.0
          %474 = vmatpush1.msra.mxu0 0.0
          %475 = vmatprep.subr.mxu0 0.0
          %476 = vmatpush1.msra.mxu0 0.0
          %477 = vmatprep.subr.mxu0 0.0
          %478 = vmatpush1.msra.mxu0 0.0
          %479 = vmatprep.subr.mxu0 0.0
          %480 = vmatpush1.msra.mxu0 0.0
          %481 = vmatprep.subr.mxu0 0.0
          %482 = vmatpush1.msra.mxu0 0.0
          %483 = vmatprep.subr.mxu0 0.0
          %484 = vmatpush1.msra.mxu0 0.0
          %485 = vmatprep.subr.mxu0 0.0
          %486 = vmatpush1.msra.mxu0 0.0
          %487 = vmatprep.subr.mxu0 0.0
          %488 = vmatpush1.msra.mxu0 0.0
          %489 = vmatprep.subr.mxu0 0.0
          %490 = vmatpush1.msra.mxu0 0.0
          %491 = vmatprep.subr.mxu0 0.0
          %492 = vmatpush1.msra.mxu0 0.0
          %493 = vmatprep.subr.mxu0 0.0
          %494 = vmatpush1.msra.mxu0 0.0
          %495 = vmatprep.subr.mxu0 0.0
          %496 = vmatpush1.msra.mxu0 0.0
          %497 = vmatprep.subr.mxu0 0.0
          %498 = vmatpush1.msra.mxu0 0.0
          %499 = vmatprep.subr.mxu0 0.0
          %500 = vmatpush1.msra.mxu0 0.0
          %501 = vmatprep.subr.mxu0 0.0
          %502 = vmatpush1.msra.mxu0 0.0
          %503 = vmatprep.mubr.f32.mxu0 0.0
          %504 = vmatmul.mubr.f32.gmra.mrb[0].mxu0 %v422
          %v505 = vpop.f32.mrb[0].mxu0
          %v506 = vadd.f32 0.0, %v505
          %v507 = vpop.f32.mrb[0].mxu0
          %508 = vdwg.mxu0
          %509 = vst [vmem:[#allocation2] sm:$0xff] %v506
        $region84: #{tpu_custom_call.1} parent=55 // pred_fallthru
          _
        %s510 = smul.u32 %s32, 8
        %s511 = scalar_lea.vmem [#allocation6], %s510
        %v512 = vld [vmem:[%s511] sm:$0x1]
        %v513 = vld [vmem:[#allocation2] sm:$0xff]
        %v514 = vlaneseq
        %v515 = vshrl.u32 %v514, 7
        %v516 = vsub.s32 0, %v515
        %v517 = vrot.slane %v512, %v516
        %v518 = vadd.f32 %v513, %v517
        %vm519 = vcmp.gt.f32.partialorder %v518, 0.0
        %v520 = vmul.f32 %v518, 0.2
        %v521 = vsel %vm519, %v518, %v520
        %v522 = vld [vmem:[#allocation9] sm:$0xff]
        %v523 = vld [vmem:[#allocation9 + $0x8] sm:$0xff]
        %v524 = vld [vmem:[#allocation9 + $0x10] sm:$0xff]
        %v525 = vld [vmem:[#allocation9 + $0x18] sm:$0xff]
        %v526 = vld [vmem:[#allocation9 + $0x20] sm:$0xff]
        %v527 = vld [vmem:[#allocation9 + $0x28] sm:$0xff]
        %v528 = vld [vmem:[#allocation9 + $0x30] sm:$0xff]
        %v529 = vld [vmem:[#allocation9 + $0x38] sm:$0xff]
        %v530 = vld [vmem:[#allocation9 + $0x40] sm:$0xff]
        %v531 = vld [vmem:[#allocation9 + $0x48] sm:$0xff]
        %v532 = vld [vmem:[#allocation9 + $0x50] sm:$0xff]
        %v533 = vld [vmem:[#allocation9 + $0x58] sm:$0xff]
        %v534 = vld [vmem:[#allocation9 + $0x60] sm:$0xff]
        %v535 = vld [vmem:[#allocation9 + $0x68] sm:$0xff]
        %v536 = vld [vmem:[#allocation9 + $0x70] sm:$0xff]
        %v537 = vld [vmem:[#allocation9 + $0x78] sm:$0xff]
        %v538 = vld [vmem:[%s4] sm:$0x1]
        %v540 = vlaneseq
        %v541 = vshrl.u32 %v540, 7
        %v542 = vsub.s32 0, %v541
        %v543 = vrot.slane %v538, %v542
        %545 = vmatprep.subr.mxu0 0.0
        %546 = vmatpush1.msra.mxu0 %v522
        %547 = vmatprep.subr.mxu0 0.0
        %548 = vmatpush1.msra.mxu0 %v523
        %549 = vmatprep.subr.mxu0 0.0
        %550 = vmatpush1.msra.mxu0 %v524
        %551 = vmatprep.subr.mxu0 0.0
        %552 = vmatpush1.msra.mxu0 %v525
        %553 = vmatprep.subr.mxu0 0.0
        %554 = vmatpush1.msra.mxu0 %v526
        %555 = vmatprep.subr.mxu0 0.0
        %556 = vmatpush1.msra.mxu0 %v527
        %557 = vmatprep.subr.mxu0 0.0
        %558 = vmatpush1.msra.mxu0 %v528
        %559 = vmatprep.subr.mxu0 0.0
        %560 = vmatpush1.msra.mxu0 %v529
        %561 = vmatprep.subr.mxu0 0.0
        %562 = vmatpush1.msra.mxu0 %v530
        %563 = vmatprep.subr.mxu0 0.0
        %564 = vmatpush1.msra.mxu0 %v531
        %565 = vmatprep.subr.mxu0 0.0
        %566 = vmatpush1.msra.mxu0 %v532
        %567 = vmatprep.subr.mxu0 0.0
        %568 = vmatpush1.msra.mxu0 %v533
        %569 = vmatprep.subr.mxu0 0.0
        %570 = vmatpush1.msra.mxu0 %v534
        %571 = vmatprep.subr.mxu0 0.0
        %572 = vmatpush1.msra.mxu0 %v535
        %573 = vmatprep.subr.mxu0 0.0
        %574 = vmatpush1.msra.mxu0 %v536
        %575 = vmatprep.subr.mxu0 0.0
        %576 = vmatpush1.msra.mxu0 %v537
        %577 = vmatprep.subr.mxu0 0.0
        %578 = vmatpush1.msra.mxu0 0.0
        %579 = vmatprep.subr.mxu0 0.0
        %580 = vmatpush1.msra.mxu0 0.0
        %581 = vmatprep.subr.mxu0 0.0
        %582 = vmatpush1.msra.mxu0 0.0
        %583 = vmatprep.subr.mxu0 0.0
        %584 = vmatpush1.msra.mxu0 0.0
        %585 = vmatprep.subr.mxu0 0.0
        %586 = vmatpush1.msra.mxu0 0.0
        %587 = vmatprep.subr.mxu0 0.0
        %588 = vmatpush1.msra.mxu0 0.0
        %589 = vmatprep.subr.mxu0 0.0
        %590 = vmatpush1.msra.mxu0 0.0
        %591 = vmatprep.subr.mxu0 0.0
        %592 = vmatpush1.msra.mxu0 0.0
        %593 = vmatprep.subr.mxu0 0.0
        %594 = vmatpush1.msra.mxu0 0.0
        %595 = vmatprep.subr.mxu0 0.0
        %596 = vmatpush1.msra.mxu0 0.0
        %597 = vmatprep.subr.mxu0 0.0
        %598 = vmatpush1.msra.mxu0 0.0
        %599 = vmatprep.subr.mxu0 0.0
        %600 = vmatpush1.msra.mxu0 0.0
        %601 = vmatprep.subr.mxu0 0.0
        %602 = vmatpush1.msra.mxu0 0.0
        %603 = vmatprep.subr.mxu0 0.0
        %604 = vmatpush1.msra.mxu0 0.0
        %605 = vmatprep.subr.mxu0 0.0
        %606 = vmatpush1.msra.mxu0 0.0
        %607 = vmatprep.subr.mxu0 0.0
        %608 = vmatpush1.msra.mxu0 0.0
        %609 = vmatprep.mubr.f32.mxu0 0.0
        %610 = vmatmul.mubr.f32.gmra.mrb[0].mxu0 %v521
        %v611 = vpop.f32.mrb[0].mxu0
        %v612 = vadd.f32 %v543, %v611
        %v613 = vpop.f32.mrb[0].mxu0
        %614 = vdwg.mxu0
        %vm615 = vcmp.gt.f32.partialorder %v612, 0.0
        %v616 = vmul.f32 %v612, 0.2
        %v617 = vsel %vm615, %v612, %v616
        %v618 = vld [vmem:[#allocation11] sm:$0xff]
        %v619 = vld [vmem:[#allocation11 + $0x8] sm:$0xff]
        %v620 = vld [vmem:[#allocation11 + $0x10] sm:$0xff]
        %v621 = vld [vmem:[#allocation11 + $0x18] sm:$0xff]
        %v622 = vld [vmem:[#allocation11 + $0x20] sm:$0xff]
        %v623 = vld [vmem:[#allocation11 + $0x28] sm:$0xff]
        %v624 = vld [vmem:[#allocation11 + $0x30] sm:$0xff]
        %v625 = vld [vmem:[#allocation11 + $0x38] sm:$0xff]
        %v626 = vld [vmem:[#allocation11 + $0x40] sm:$0xff]
        %v627 = vld [vmem:[#allocation11 + $0x48] sm:$0xff]
        %v628 = vld [vmem:[#allocation11 + $0x50] sm:$0xff]
        %v629 = vld [vmem:[#allocation11 + $0x58] sm:$0xff]
        %v630 = vld [vmem:[#allocation11 + $0x60] sm:$0xff]
        %v631 = vld [vmem:[#allocation11 + $0x68] sm:$0xff]
        %v632 = vld [vmem:[#allocation11 + $0x70] sm:$0xff]
        %v633 = vld [vmem:[#allocation11 + $0x78] sm:$0xff]
        %v634 = vld [vmem:[%s6] sm:$0x1]
        %v636 = vlaneseq
        %v637 = vshrl.u32 %v636, 7
        %v638 = vsub.s32 0, %v637
        %v639 = vrot.slane %v634, %v638
        %641 = vmatprep.subr.mxu0 0.0
        %642 = vmatpush1.msra.mxu0 %v618
        %643 = vmatprep.subr.mxu0 0.0
        %644 = vmatpush1.msra.mxu0 %v619
        %645 = vmatprep.subr.mxu0 0.0
        %646 = vmatpush1.msra.mxu0 %v620
        %647 = vmatprep.subr.mxu0 0.0
        %648 = vmatpush1.msra.mxu0 %v621
        %649 = vmatprep.subr.mxu0 0.0
        %650 = vmatpush1.msra.mxu0 %v622
        %651 = vmatprep.subr.mxu0 0.0
        %652 = vmatpush1.msra.mxu0 %v623
        %653 = vmatprep.subr.mxu0 0.0
        %654 = vmatpush1.msra.mxu0 %v624
        %655 = vmatprep.subr.mxu0 0.0
        %656 = vmatpush1.msra.mxu0 %v625
        %657 = vmatprep.subr.mxu0 0.0
        %658 = vmatpush1.msra.mxu0 %v626
        %659 = vmatprep.subr.mxu0 0.0
        %660 = vmatpush1.msra.mxu0 %v627
        %661 = vmatprep.subr.mxu0 0.0
        %662 = vmatpush1.msra.mxu0 %v628
        %663 = vmatprep.subr.mxu0 0.0
        %664 = vmatpush1.msra.mxu0 %v629
        %665 = vmatprep.subr.mxu0 0.0
        %666 = vmatpush1.msra.mxu0 %v630
        %667 = vmatprep.subr.mxu0 0.0
        %668 = vmatpush1.msra.mxu0 %v631
        %669 = vmatprep.subr.mxu0 0.0
        %670 = vmatpush1.msra.mxu0 %v632
        %671 = vmatprep.subr.mxu0 0.0
        %672 = vmatpush1.msra.mxu0 %v633
        %673 = vmatprep.subr.mxu0 0.0
        %674 = vmatpush1.msra.mxu0 0.0
        %675 = vmatprep.subr.mxu0 0.0
        %676 = vmatpush1.msra.mxu0 0.0
        %677 = vmatprep.subr.mxu0 0.0
        %678 = vmatpush1.msra.mxu0 0.0
        %679 = vmatprep.subr.mxu0 0.0
        %680 = vmatpush1.msra.mxu0 0.0
        %681 = vmatprep.subr.mxu0 0.0
        %682 = vmatpush1.msra.mxu0 0.0
        %683 = vmatprep.subr.mxu0 0.0
        %684 = vmatpush1.msra.mxu0 0.0
        %685 = vmatprep.subr.mxu0 0.0
        %686 = vmatpush1.msra.mxu0 0.0
        %687 = vmatprep.subr.mxu0 0.0
        %688 = vmatpush1.msra.mxu0 0.0
        %689 = vmatprep.subr.mxu0 0.0
        %690 = vmatpush1.msra.mxu0 0.0
        %691 = vmatprep.subr.mxu0 0.0
        %692 = vmatpush1.msra.mxu0 0.0
        %693 = vmatprep.subr.mxu0 0.0
        %694 = vmatpush1.msra.mxu0 0.0
        %695 = vmatprep.subr.mxu0 0.0
        %696 = vmatpush1.msra.mxu0 0.0
        %697 = vmatprep.subr.mxu0 0.0
        %698 = vmatpush1.msra.mxu0 0.0
        %699 = vmatprep.subr.mxu0 0.0
        %700 = vmatpush1.msra.mxu0 0.0
        %701 = vmatprep.subr.mxu0 0.0
        %702 = vmatpush1.msra.mxu0 0.0
        %703 = vmatprep.subr.mxu0 0.0
        %704 = vmatpush1.msra.mxu0 0.0
        %705 = vmatprep.mubr.f32.mxu0 0.0
        %706 = vmatmul.mubr.f32.gmra.mrb[0].mxu0 %v617
        %v707 = vpop.f32.mrb[0].mxu0
        %v708 = vadd.f32 %v639, %v707
        %v709 = vpop.f32.mrb[0].mxu0
        %710 = vdwg.mxu0
        %vm711 = vcmp.gt.f32.partialorder %v708, 0.0
        %v712 = vmul.f32 %v708, 0.2
        %v713 = vsel %vm711, %v708, %v712
        %v714 = vld [vmem:[#allocation12] sm:$0xff]
        %v715 = vld [vmem:[#allocation12 + $0x8] sm:$0xff]
        %v716 = vld [vmem:[#allocation12 + $0x10] sm:$0xff]
        %v717 = vld [vmem:[#allocation12 + $0x18] sm:$0xff]
        %v718 = vld [vmem:[#allocation12 + $0x20] sm:$0xff]
        %v719 = vld [vmem:[#allocation12 + $0x28] sm:$0xff]
        %v720 = vld [vmem:[#allocation12 + $0x30] sm:$0xff]
        %v721 = vld [vmem:[#allocation12 + $0x38] sm:$0xff]
        %v722 = vld [vmem:[#allocation12 + $0x40] sm:$0xff]
        %v723 = vld [vmem:[#allocation12 + $0x48] sm:$0xff]
        %v724 = vld [vmem:[#allocation12 + $0x50] sm:$0xff]
        %v725 = vld [vmem:[#allocation12 + $0x58] sm:$0xff]
        %v726 = vld [vmem:[#allocation12 + $0x60] sm:$0xff]
        %v727 = vld [vmem:[#allocation12 + $0x68] sm:$0xff]
        %v728 = vld [vmem:[#allocation12 + $0x70] sm:$0xff]
        %v729 = vld [vmem:[#allocation12 + $0x78] sm:$0xff]
        %v730 = vld [vmem:[%s8] sm:$0x1]
        %v732 = vlaneseq
        %v733 = vshrl.u32 %v732, 7
        %v734 = vsub.s32 0, %v733
        %v735 = vrot.slane %v730, %v734
        %737 = vmatprep.subr.mxu0 0.0
        %738 = vmatpush1.msra.mxu0 %v714
        %739 = vmatprep.subr.mxu0 0.0
        %740 = vmatpush1.msra.mxu0 %v715
        %741 = vmatprep.subr.mxu0 0.0
        %742 = vmatpush1.msra.mxu0 %v716
        %743 = vmatprep.subr.mxu0 0.0
        %744 = vmatpush1.msra.mxu0 %v717
        %745 = vmatprep.subr.mxu0 0.0
        %746 = vmatpush1.msra.mxu0 %v718
        %747 = vmatprep.subr.mxu0 0.0
        %748 = vmatpush1.msra.mxu0 %v719
        %749 = vmatprep.subr.mxu0 0.0
        %750 = vmatpush1.msra.mxu0 %v720
        %751 = vmatprep.subr.mxu0 0.0
        %752 = vmatpush1.msra.mxu0 %v721
        %753 = vmatprep.subr.mxu0 0.0
        %754 = vmatpush1.msra.mxu0 %v722
        %755 = vmatprep.subr.mxu0 0.0
        %756 = vmatpush1.msra.mxu0 %v723
        %757 = vmatprep.subr.mxu0 0.0
        %758 = vmatpush1.msra.mxu0 %v724
        %759 = vmatprep.subr.mxu0 0.0
        %760 = vmatpush1.msra.mxu0 %v725
        %761 = vmatprep.subr.mxu0 0.0
        %762 = vmatpush1.msra.mxu0 %v726
        %763 = vmatprep.subr.mxu0 0.0
        %764 = vmatpush1.msra.mxu0 %v727
        %765 = vmatprep.subr.mxu0 0.0
        %766 = vmatpush1.msra.mxu0 %v728
        %767 = vmatprep.subr.mxu0 0.0
        %768 = vmatpush1.msra.mxu0 %v729
        %769 = vmatprep.subr.mxu0 0.0
        %770 = vmatpush1.msra.mxu0 0.0
        %771 = vmatprep.subr.mxu0 0.0
        %772 = vmatpush1.msra.mxu0 0.0
        %773 = vmatprep.subr.mxu0 0.0
        %774 = vmatpush1.msra.mxu0 0.0
        %775 = vmatprep.subr.mxu0 0.0
        %776 = vmatpush1.msra.mxu0 0.0
        %777 = vmatprep.subr.mxu0 0.0
        %778 = vmatpush1.msra.mxu0 0.0
        %779 = vmatprep.subr.mxu0 0.0
        %780 = vmatpush1.msra.mxu0 0.0
        %781 = vmatprep.subr.mxu0 0.0
        %782 = vmatpush1.msra.mxu0 0.0
        %783 = vmatprep.subr.mxu0 0.0
        %784 = vmatpush1.msra.mxu0 0.0
        %785 = vmatprep.subr.mxu0 0.0
        %786 = vmatpush1.msra.mxu0 0.0
        %787 = vmatprep.subr.mxu0 0.0
        %788 = vmatpush1.msra.mxu0 0.0
        %789 = vmatprep.subr.mxu0 0.0
        %790 = vmatpush1.msra.mxu0 0.0
        %791 = vmatprep.subr.mxu0 0.0
        %792 = vmatpush1.msra.mxu0 0.0
        %793 = vmatprep.subr.mxu0 0.0
        %794 = vmatpush1.msra.mxu0 0.0
        %795 = vmatprep.subr.mxu0 0.0
        %796 = vmatpush1.msra.mxu0 0.0
        %797 = vmatprep.subr.mxu0 0.0
        %798 = vmatpush1.msra.mxu0 0.0
        %799 = vmatprep.subr.mxu0 0.0
        %800 = vmatpush1.msra.mxu0 0.0
        %801 = vmatprep.mubr.f32.mxu0 0.0
        %802 = vmatmul.mubr.f32.gmra.mrb[0].mxu0 %v713
        %v803 = vpop.f32.mrb[0].mxu0
        %v804 = vadd.f32 %v735, %v803
        %v805 = vpop.f32.mrb[0].mxu0
        %806 = vdwg.mxu0
        %v807 = vlaneseq
        %v808 = vand.u32 %v807, 127
        %vm809 = vcmp.lt.s32.totalorder %v808, 8
        %v810 = vsel %vm809, %v804, -1e+30
        %811 = vmax.xlane.f32.xlu0 %v810
        %v812 = vpop.xlane.xlu0 %811
        %v813 = vsub.f32 %v810, %v812
        %v814 = vmul.f32 %v813, 1.442695
        %v815 = vpow.pop %v814
        %816 = vadd.xlane.f32.xlu0 %v815
        %v817 = vpop.xlane.xlu0 %816
        %v818 = vrcp.pop %v817
        %v819 = vmul.f32 %v815, %v818
        %820 = vst [vmem:[%s417] sm:$0xff] %v819
        %s821 = sand.u32 %s243, 1
        %s822 = scalar_lea.sflag [#allocation5], %s821
        %s823 = sand.u32 %s243, 1
        %s824 = smul.addr %s823, 8
        %s825 = scalar_lea.vmem [#allocation14], %s824
        // Predicated region
        $region85: #{tpu_custom_call.1} parent=55 // pred_check
          %p826 = pneg %p253
        $region86: #{tpu_custom_call.1} parent=55 // pred_check_branch
          %828 = sbr.rel (%p826) target = $region88
        $region87: #{tpu_custom_call.1} parent=55 // pred_region
          %s830 = ssub.s32 128, 128
          %831 = vsyncadd %s822, %s830
          %s832 = smul.addr %s31, 4
          %s833 = sadd.s32 %s32, %s832
          %s834 = smul.addr %s833, 128
          %s835 = scalar_lea.hbm %s9, %s834
          %s837 = sshll.u32 %s825, 4
          %s838 = int_to_ptr.vmem [resolvable:$true] %s837
          %840 = dma.vmem_to_hbm [thread:$0]  %s838, 128, %s835, %s822
        $region88: #{tpu_custom_call.1} parent=55 // pred_fallthru
          _
      $region56: #{tpu_custom_call.1} parent=5 // pred_fallthru
        _
      %p841 = scmp.le.s32.totalorder 2, %s22
      // Predicated region
      $region89: #{tpu_custom_call.1} parent=5 // pred_check
        %p842 = pneg %p841
      $region90: #{tpu_custom_call.1} parent=5 // pred_check_branch
        %844 = sbr.rel (%p842) target = $region92
      $region91: #{tpu_custom_call.1} parent=5 // pred_region
        %s845 = ssub.s32 %s22, 2
        // Predicated region
        $region93: #{tpu_custom_call.1} parent=91 // pred_check
          %p846 = pneg %p259
        $region94: #{tpu_custom_call.1} parent=91 // pred_check_branch
          %848 = sbr.rel (%p846) target = $region96
        $region95: #{tpu_custom_call.1} parent=91 // pred_region
          %s849 = sand.u32 %s244, 1
          %s850 = scalar_lea.sflag [#allocation5], %s849
          %s851 = sand.u32 %s244, 1
          %s852 = smul.addr %s851, 8
          %s853 = scalar_lea.vmem [#allocation14], %s852
          %854 = dma.done %s850, 128
        $region96: #{tpu_custom_call.1} parent=91 // pred_fallthru
          _
      $region92: #{tpu_custom_call.1} parent=5 // pred_fallthru
        _
    $region6: #{tpu_custom_call.1} parent=1 // loop_footer
      %s26 = sadd.s32 1, %s22
    $region7: #{tpu_custom_call.1} parent=1 // loop_footer_branch
      %21 = sbr.rel target = $region3
    $region8: #{tpu_custom_call.1} parent=1 // loop_exit
      _
    %855 = vsyncpa [#allocation4], 1
    %s856 = scalar_lea.sflag [#allocation4], 1
    %857 = vsyncpa %s856, 1
    %858 = vsyncpa [#allocation7], 1
    %859 = vsyncpa [#allocation10], 1
    %860 = vsyncpa [#allocation13], 1
    %861 = vsyncpa [#allocation5], 1
    %s862 = scalar_lea.sflag [#allocation5], 1
    %863 = vsyncpa %s862, 1

</llo_original>
